<compile_context>
chip_gen: v7x
topology: tpu7x:2x2x1
jax: 0.10.0
libtpu: 0.0.40
codegen_flags: <defaults>
</compile_context>

<pallas_src>
from functools import partial

import jax
import jax.numpy as jnp
from jax import lax
from jax.experimental import pallas as pl
from jax.experimental.pallas import tpu as pltpu


def _round_up(x, m):
    return ((x + m - 1) // m) * m


def _maybe_pad(x, target_shape):
    pads = tuple((0, t - s) for s, t in zip(x.shape, target_shape))
    if any(p[1] for p in pads):
        return jnp.pad(x, pads)
    return x


def _cpt_as_kernel(h_ref, ht_ref, pw_ref,
                   wg_ref, bg_ref, wlr_ref, wlh_ref, bl_ref,
                   out_ref,
                   m_sc, l_sc, acc_sc,
                   *, use_bf16, approx_recip, l2_true, kv_block, mask_kv):
    Bb, L1, D = h_ref.shape          # padded tile dims (L1 mult of 8, D mult of 128)
    mm = jnp.bfloat16 if use_bf16 else jnp.float32

    kk = pl.program_id(1)            # kv-block index (reduction axis)
    nk = pl.num_programs(1)

    @pl.when(kk == 0)
    def _init():
        m_sc[...] = jnp.full_like(m_sc, -jnp.inf)
        l_sc[...] = jnp.zeros_like(l_sc)
        acc_sc[...] = jnp.zeros_like(acc_sc)

    # Hoisted casts: each operand converted to the MXU dtype exactly once.
    h = h_ref[...]                    # (Bb, L1, D) f32
    h_b = h.astype(mm)
    ht_b = ht_ref[...].astype(mm)     # (Bb, Lk, D)

    # scores for this kv block -- batched contraction, no explicit transpose.
    s = lax.dot_general(h_b, ht_b,
                        dimension_numbers=(((2,), (2,)), ((0,), (0,))),
                        preferred_element_type=jnp.float32)        # (Bb, L1, Lk)
    if mask_kv:
        # Additive mask on zero-padded key columns (keeps softmax exact).
        kv_ids = kk * kv_block + lax.broadcasted_iota(jnp.int32, (1, 1, kv_block), 2)
        s = jnp.where(kv_ids < l2_true, s, -1e30)

    # Online-softmax accumulation (flash pattern).
    m_prev = m_sc[...]
    m_new = jnp.maximum(m_prev, jnp.max(s, axis=-1, keepdims=True))
    corr = jnp.exp(m_prev - m_new)
    p = jnp.exp(s - m_new)                                          # (Bb, L1, Lk)
    l_sc[...] = corr * l_sc[...] + jnp.sum(p, axis=-1, keepdims=True)
    pv = lax.dot_general(p.astype(mm), ht_b,
                         dimension_numbers=(((2,), (1,)), ((0,), (0,))),
                         preferred_element_type=jnp.float32)        # (Bb, L1, D)
    acc_sc[...] = corr * acc_sc[...] + pv
    m_sc[...] = m_new

    @pl.when(kk == nk - 1)
    def _finalize():
        inv_l = pl.reciprocal(l_sc[...], approx=approx_recip)       # (Bb, L1, 1)
        r = acc_sc[...] * inv_l                                     # (Bb, L1, D)

        # Fold batch into the MXU M dimension for the batch-independent matmuls.
        h2 = h.reshape(Bb * L1, D)
        h2_b = h_b.reshape(Bb * L1, D)
        r2_b = r.reshape(Bb * L1, D).astype(mm)

        # t = sigmoid(as_gate(h))
        t = jax.nn.sigmoid(
            jnp.dot(h2_b, wg_ref[...].astype(mm),
                    preferred_element_type=jnp.float32) + bg_ref[...])

        # h_new = tanh(linear(cat([r, h], -1))) * position_weights
        lin = (jnp.dot(r2_b, wlr_ref[...].astype(mm),
                       preferred_element_type=jnp.float32)
               + jnp.dot(h2_b, wlh_ref[...].astype(mm),
                         preferred_element_type=jnp.float32)
               + bl_ref[...])
        h_new = jnp.tanh(lin) * pw_ref[...].reshape(Bb * L1, 1)

        # out = t*h_new + (1-t)*h  ==  h + t*(h_new - h)
        out = h2 + t * (h_new - h2)
        out_ref[...] = out.reshape(Bb, L1, D)


def prepare_params(params, dim):
    """Split cat([r,h]) weight and zero-pad all weights to lane-aligned shapes ONCE."""
    D = dim
    Dp = _round_up(D, 128)
    wg, bg, wl, bl = params["wg"], params["bg"], params["wl"], params["bl"]
    # Residual (1-t)*h and the wl row split require dim_out == dim_in.
    assert wg.shape == (D, D), "dim_out must equal dim_in for CPT_AS"
    assert wl.shape == (2 * D, D)
    pd = Dp - D

    def pad2(w):
        return jnp.pad(w, ((0, pd), (0, pd))) if pd else w

    def pad1(b):
        return (jnp.pad(b, (0, pd)) if pd else b).reshape(1, Dp)

    # cat([r, h]) @ wl  ==  r @ wl[:D] + h @ wl[D:]
    return {"wg": pad2(wg), "bg": pad1(bg),
            "wlr": pad2(wl[:D, :]), "wlh": pad2(wl[D:, :]), "bl": pad1(bl),
            "dim": D, "dim_padded": Dp}


def _vmem_bytes(Bb, L1p, Lk, Dp, weight_bufs):
    """Rough per-step VMEM footprint (double-buffered tiles + weights + scratch + live)."""
    f32, b16 = 4, 2
    tiles = 2 * (Bb * L1p * Dp + Bb * Lk * Dp + Bb * L1p * Dp + Bb * L1p) * f32
    weights = weight_bufs * (3 * Dp * Dp + 2 * Dp) * f32
    scratch = (Bb * L1p * Dp + 2 * Bb * L1p) * f32
    live = (Bb * L1p * Lk * (f32 + b16)              # scores/exp + bf16 copy
            + Bb * L1p * Dp * (3 * f32 + b16)        # r / lin / out slabs + h bf16
            + Bb * Lk * Dp * b16)                    # ht bf16
    return tiles + weights + scratch + live


_SINGLE_BUFFER_WEIGHTS_OK = None   # cache: does this JAX accept pipeline_mode=pl.Buffered(1)?


def cpt_as_forward(h, ht, position_weights, params, *,
                   use_bf16_matmul=True, approx_recip=False,
                   batch_block=None, kv_block=None,
                   vmem_budget_bytes=24 * 1024 * 1024):
    """h: (B,L1,D), ht: (B,L2,D), position_weights: (B,L1). params: raw or prepare_params output."""
    global _SINGLE_BUFFER_WEIGHTS_OK

    B, L1, D = h.shape
    _, L2, _ = ht.shape

    if "wlr" not in params:                 # raw torch-style params -> split/pad now
        params = prepare_params(params, D)
    assert params["dim"] == D
    Dp = params["dim_padded"]
    wg_p, bg_p = params["wg"], params["bg"]
    wlr_p, wlh_p, bl_p = params["wlr"], params["wlh"], params["bl"]

    # Lane/sublane-dense activation dims. (For very small D one could also keep the
    # true D as the lane dim to avoid the pad traffic; kept padded here for MXU/VPU density.)
    L1p = _round_up(L1, 8)

    # L2 is tiled (flash-style) so ht never needs to be fully VMEM-resident.
    # The kv block is the lane dim of the scores -> keep it a multiple of 128.
    if kv_block is None:
        L2p = _round_up(L2, 128)
        if L2p <= 512:
            Lk = L2p
        else:
            Lk = 512
            L2p = _round_up(L2, Lk)
    else:
        Lk = kv_block
        L2p = _round_up(L2, Lk)
    nk = L2p // Lk
    mask_kv = L2p != L2

    # Batch block sized to an explicit VMEM budget (v7x: 64 MiB physical / 32 MiB scoped
    # default); keep >= 2 parallel batch steps so both v7x TensorCores get work
    # (harmless on single-TC v5e/v6e: ~0.35 us extra grid-step overhead).
    if batch_block is None:
        Bb = 1
        for cand in range(min(B, 8), 0, -1):
            if B > 1 and pl.cdiv(B, cand) < 2:
                continue
            if _vmem_bytes(cand, L1p, Lk, Dp, 1) <= vmem_budget_bytes:
                Bb = cand
                break
    else:
        Bb = batch_block
    Bp = pl.cdiv(B, Bb) * Bb

    # Pad activations only when actually needed (padding is a full extra HBM pass).
    # Zero-padded D columns contribute 0 to every contraction; padded keys are masked
    # in-kernel; padded L1 rows / batches are sliced off at the end.
    h_p = _maybe_pad(h, (Bp, L1p, Dp))
    ht_p = _maybe_pad(ht, (Bp, L2p, Dp))
    pw_p = _maybe_pad(position_weights.reshape(B, L1, 1), (Bp, L1p, 1))

    grid = (Bp // Bb, nk)

    kernel = partial(_cpt_as_kernel, use_bf16=use_bf16_matmul,
                     approx_recip=approx_recip, l2_true=L2,
                     kv_block=Lk, mask_kv=mask_kv)

    est = _vmem_bytes(Bb, L1p, Lk, Dp, 2)
    vmem_limit = int(min(56 * 2**20, max(24 * 2**20, 2 * est)))

    flops = Bp * (3 * 2 * L1p * Dp * Dp + 2 * 2 * L1p * L2p * Dp)
    transcendentals = Bp * L1p * (2 * Dp + L2p + 1)
    bytes_accessed = 4 * (h_p.size + ht_p.size + pw_p.size + wg_p.size + bg_p.size
                          + wlr_p.size + wlh_p.size + bl_p.size + Bp * L1p * Dp)

    def invoke(single_buffer_weights):
        # Grid-invariant weight operands: single-buffer them to halve their VMEM footprint.
        w_kw = dict(pipeline_mode=pl.Buffered(1)) if single_buffer_weights else {}
        widx = lambda b, k: (0, 0)
        grid_spec = pltpu.PrefetchScalarGridSpec(
            num_scalar_prefetch=0,
            grid=grid,
            in_specs=[
                pl.BlockSpec((Bb, L1p, Dp), lambda b, k: (b, 0, 0)),   # h (resident over k)
                pl.BlockSpec((Bb, Lk, Dp), lambda b, k: (b, k, 0)),    # ht kv tile
                pl.BlockSpec((Bb, L1p, 1), lambda b, k: (b, 0, 0)),    # position weights
                pl.BlockSpec((Dp, Dp), widx, **w_kw),                  # wg
                pl.BlockSpec((1, Dp), widx, **w_kw),                   # bg
                pl.BlockSpec((Dp, Dp), widx, **w_kw),                  # wl (r half)
                pl.BlockSpec((Dp, Dp), widx, **w_kw),                  # wl (h half)
                pl.BlockSpec((1, Dp), widx, **w_kw),                   # bl
            ],
            out_specs=pl.BlockSpec((Bb, L1p, Dp), lambda b, k: (b, 0, 0)),
            scratch_shapes=[
                pltpu.VMEM((Bb, L1p, 1), jnp.float32),    # running max
                pltpu.VMEM((Bb, L1p, 1), jnp.float32),    # running denom
                pltpu.VMEM((Bb, L1p, Dp), jnp.float32),   # running alpha @ ht
            ])
        return pl.pallas_call(
            kernel,
            out_shape=jax.ShapeDtypeStruct((Bp, L1p, Dp), jnp.float32),
            grid_spec=grid_spec,
            compiler_params=pltpu.CompilerParams(
                dimension_semantics=("parallel", "arbitrary"),
                vmem_limit_bytes=vmem_limit),
            cost_estimate=pl.CostEstimate(
                flops=int(flops),
                transcendentals=int(transcendentals),
                bytes_accessed=int(bytes_accessed)),
        )(h_p, ht_p, pw_p, wg_p, bg_p, wlr_p, wlh_p, bl_p)

    if _SINGLE_BUFFER_WEIGHTS_OK is None:
        try:
            out_p = jax.block_until_ready(invoke(True))
            _SINGLE_BUFFER_WEIGHTS_OK = True
        except Exception:
            _SINGLE_BUFFER_WEIGHTS_OK = False
            out_p = invoke(False)
    else:
        out_p = invoke(_SINGLE_BUFFER_WEIGHTS_OK)

    return out_p[:B, :L1, :D]


def cpt_as_reference(h, ht, position_weights, params):
    """Pure-JAX reference of the PyTorch forward pass."""
    wg, bg, wl, bl = params["wg"], params["bg"], params["wl"], params["bl"]
    t = jax.nn.sigmoid(jnp.einsum("bld,de->ble", h, wg) + bg)
    scores = jnp.einsum("bld,bkd->blk", h, ht)
    alpha = jax.nn.softmax(scores, axis=-1)
    r = jnp.einsum("blk,bkd->bld", alpha, ht)
    cat = jnp.concatenate([r, h], axis=-1)
    h_new = jnp.tanh(jnp.einsum("blc,ce->ble", cat, wl) + bl)
    h_new = h_new * position_weights[:, :, None]
    return t * h_new + (1.0 - t) * h


def init_params(dim_in, dim_out, key):
    k1, k2, k3, k4 = jax.random.split(key, 4)
    scale_g = 1.0 / jnp.sqrt(dim_in)
    scale_l = 1.0 / jnp.sqrt(2 * dim_in)
    return {
        "wg": jax.random.uniform(k1, (dim_in, dim_out), jnp.float32, -scale_g, scale_g),
        "bg": jax.random.uniform(k2, (dim_out,), jnp.float32, -scale_g, scale_g),
        "wl": jax.random.uniform(k3, (2 * dim_in, dim_out), jnp.float32, -scale_l, scale_l),
        "bl": jax.random.uniform(k4, (dim_out,), jnp.float32, -scale_l, scale_l),
    }


if __name__ == "__main__":
    # dim_out must equal dim_in for the residual (1-t)*h to make sense.
    B, L1, L2, D = 2, 16, 8, 32

    key = jax.random.PRNGKey(0)
    kh, kht, kpw, kparam = jax.random.split(key, 4)
    h = jax.random.normal(kh, (B, L1, D), jnp.float32)
    ht = jax.random.normal(kht, (B, L2, D), jnp.float32)
    position_weights = jax.random.uniform(kpw, (B, L1), jnp.float32)

    params = init_params(D, D, kparam)
    padded_params = prepare_params(params, D)     # pad/split weights once (static)

    ref = cpt_as_reference(h, ht, position_weights, params)

    # Default fast path: bf16 MXU operands, f32 accumulation.
    out = cpt_as_forward(h, ht, position_weights, padded_params)
    out = jax.block_until_ready(out)
    assert out.shape == (B, L1, D)
    assert jnp.allclose(out, ref, atol=5e-2, rtol=5e-2), "bf16 path mismatch vs reference"

    # Full-f32 path for a tight numerical check.
    out_f32 = cpt_as_forward(h, ht, position_weights, padded_params,
                             use_bf16_matmul=False, approx_recip=False)
    out_f32 = jax.block_until_ready(out_f32)
    assert jnp.allclose(out_f32, ref, atol=1e-4, rtol=1e-4), "f32 path mismatch vs reference"

    print("KERNEL_OK")
</pallas_src>

<mosaic_0001>
module attributes {stable_mosaic.version = 11 : i64} {
  func.func @_cpt_as_kernel(%arg0: i32, %arg1: i32, %arg2: memref<1x16x128xf32, #tpu.memory_space<vmem>>, %arg3: memref<1x128x128xf32, #tpu.memory_space<vmem>>, %arg4: memref<1x16x1xf32, #tpu.memory_space<vmem>>, %arg5: memref<128x128xf32, #tpu.memory_space<vmem>>, %arg6: memref<1x128xf32, #tpu.memory_space<vmem>>, %arg7: memref<128x128xf32, #tpu.memory_space<vmem>>, %arg8: memref<128x128xf32, #tpu.memory_space<vmem>>, %arg9: memref<1x128xf32, #tpu.memory_space<vmem>>, %arg10: memref<1x16x128xf32, #tpu.memory_space<vmem>>, %arg11: memref<1x16x1xf32, #tpu.memory_space<vmem>>, %arg12: memref<1x16x1xf32, #tpu.memory_space<vmem>>, %arg13: memref<1x16x128xf32, #tpu.memory_space<vmem>>) attributes {dimension_semantics = [#tpu.dimension_semantics<parallel>, #tpu.dimension_semantics<arbitrary>], iteration_bounds = array<i64: 2, 1>, scalar_prefetch = 0 : i64, scratch_operands = 3 : i64, tpu.core_type = #tpu.core_type<tc>, window_params = [{transform_indices = @transform_0, window_bounds = array<i64: 1, 16, 128>}, {transform_indices = @transform_1, window_bounds = array<i64: 1, 128, 128>}, {transform_indices = @transform_2, window_bounds = array<i64: 1, 16, 1>}, {pipeline_mode = #tpu.pipeline_mode<synchronous>, transform_indices = @transform_3, window_bounds = array<i64: 128, 128>}, {pipeline_mode = #tpu.pipeline_mode<synchronous>, transform_indices = @transform_4, window_bounds = array<i64: 1, 128>}, {pipeline_mode = #tpu.pipeline_mode<synchronous>, transform_indices = @transform_5, window_bounds = array<i64: 128, 128>}, {pipeline_mode = #tpu.pipeline_mode<synchronous>, transform_indices = @transform_6, window_bounds = array<i64: 128, 128>}, {pipeline_mode = #tpu.pipeline_mode<synchronous>, transform_indices = @transform_7, window_bounds = array<i64: 1, 128>}, {transform_indices = @transform_8, window_bounds = array<i64: 1, 16, 128>}]} {
    %c0_i32 = arith.constant 0 : i32
    %0 = arith.cmpi eq, %arg1, %c0_i32 : i32
    %1 = arith.extui %0 : i1 to i32
    %c0_i32_0 = arith.constant 0 : i32
    %2 = arith.cmpi ne, %1, %c0_i32_0 : i32
    scf.if %2 {
      %cst_30 = arith.constant 0xFF800000 : f32
      %44 = vector.broadcast %cst_30 : f32 to vector<1x16x1xf32>
      %c0_31 = arith.constant 0 : index
      %c0_32 = arith.constant 0 : index
      %c0_33 = arith.constant 0 : index
      %45 = vector.load %arg11[%c0_31, %c0_32, %c0_33] : memref<1x16x1xf32, #tpu.memory_space<vmem>>, vector<1x16x1xf32>
      tpu.vector_store %arg11[%c0_31, %c0_32, %c0_33], %44 {strides = array<i32>} : memref<1x16x1xf32, #tpu.memory_space<vmem>>, vector<1x16x1xf32>,
      %cst_34 = arith.constant 0.000000e+00 : f32
      %46 = vector.broadcast %cst_34 : f32 to vector<1x16x1xf32>
      %c0_35 = arith.constant 0 : index
      %c0_36 = arith.constant 0 : index
      %c0_37 = arith.constant 0 : index
      %47 = vector.load %arg12[%c0_35, %c0_36, %c0_37] : memref<1x16x1xf32, #tpu.memory_space<vmem>>, vector<1x16x1xf32>
      tpu.vector_store %arg12[%c0_35, %c0_36, %c0_37], %46 {strides = array<i32>} : memref<1x16x1xf32, #tpu.memory_space<vmem>>, vector<1x16x1xf32>,
      %cst_38 = arith.constant 0.000000e+00 : f32
      %48 = vector.broadcast %cst_38 : f32 to vector<1x16x128xf32>
      %c0_39 = arith.constant 0 : index
      %c0_40 = arith.constant 0 : index
      %c0_41 = arith.constant 0 : index
      %49 = vector.load %arg13[%c0_39, %c0_40, %c0_41] : memref<1x16x128xf32, #tpu.memory_space<vmem>>, vector<1x16x128xf32>
      tpu.vector_store %arg13[%c0_39, %c0_40, %c0_41], %48 {strides = array<i32>} : memref<1x16x128xf32, #tpu.memory_space<vmem>>, vector<1x16x128xf32>,
    } else {
    }
    %c0 = arith.constant 0 : index
    %c0_1 = arith.constant 0 : index
    %c0_2 = arith.constant 0 : index
    %3 = vector.load %arg2[%c0, %c0_1, %c0_2] : memref<1x16x128xf32, #tpu.memory_space<vmem>>, vector<1x16x128xf32>
    %4 = arith.truncf %3 : vector<1x16x128xf32> to vector<1x16x128xbf16>
    %c0_3 = arith.constant 0 : index
    %c0_4 = arith.constant 0 : index
    %c0_5 = arith.constant 0 : index
    %5 = vector.load %arg3[%c0_3, %c0_4, %c0_5] : memref<1x128x128xf32, #tpu.memory_space<vmem>>, vector<1x128x128xf32>
    %6 = arith.truncf %5 : vector<1x128x128xf32> to vector<1x128x128xbf16>
    %cst = arith.constant dense<0.000000e+00> : vector<1x16x128xf32>
    %7 = tpu.matmul %4, %6, %cst {dimension_numbers = #tpu.dot_dimension_numbers<[2], [2], [1], [1], [0, 0, 0, 1, 1, 1], [0], [0]>} : vector<1x16x128xbf16>, vector<1x128x128xbf16>, vector<1x16x128xf32> -> vector<1x16x128xf32>
    %c128_i32 = arith.constant 128 : i32
    %8 = arith.muli %arg1, %c128_i32 : i32
    %9 = tpu.iota {dimensions = array<i32: 2>} : vector<1x1x128xi32>
    %10 = vector.broadcast %8 : i32 to vector<1x1x128xi32>
    %11 = arith.addi %10, %9 : vector<1x1x128xi32>
    %c8_i32 = arith.constant 8 : i32
    %12 = vector.broadcast %c8_i32 : i32 to vector<1x1x128xi32>
    %13 = arith.cmpi slt, %11, %12 : vector<1x1x128xi32>
    %cst_6 = arith.constant -1.000000e+30 : f32
    %14 = vector.shape_cast %13 : vector<1x1x128xi1> to vector<1x1x128xi1>
    %15 = vector.broadcast %14 : vector<1x1x128xi1> to vector<1x16x128xi1>
    %16 = vector.broadcast %cst_6 : f32 to vector<1x16x128xf32>
    %17 = arith.select %15, %7, %16 : vector<1x16x128xi1>, vector<1x16x128xf32>
    %c0_7 = arith.constant 0 : index
    %c0_8 = arith.constant 0 : index
    %c0_9 = arith.constant 0 : index
    %18 = vector.load %arg11[%c0_7, %c0_8, %c0_9] : memref<1x16x1xf32, #tpu.memory_space<vmem>>, vector<1x16x1xf32>
    %cst_10 = arith.constant dense<0xFF800000> : vector<1x16xf32>
    %19 = vector.multi_reduction <maximumf>, %17, %cst_10 [2] : vector<1x16x128xf32> to vector<1x16xf32>
    %20 = vector.shape_cast %19 : vector<1x16xf32> to vector<1x16x1xf32>
    %21 = arith.maximumf %18, %20 : vector<1x16x1xf32>
    %22 = arith.subf %18, %21 : vector<1x16x1xf32>
    %23 = math.exp %22 : vector<1x16x1xf32>
    %24 = vector.broadcast %21 : vector<1x16x1xf32> to vector<1x16x128xf32>
    %25 = arith.subf %17, %24 : vector<1x16x128xf32>
    %26 = math.exp %25 : vector<1x16x128xf32>
    %c0_11 = arith.constant 0 : index
    %c0_12 = arith.constant 0 : index
    %c0_13 = arith.constant 0 : index
    %27 = vector.load %arg12[%c0_11, %c0_12, %c0_13] : memref<1x16x1xf32, #tpu.memory_space<vmem>>, vector<1x16x1xf32>
    %28 = arith.mulf %23, %27 : vector<1x16x1xf32>
    %cst_14 = arith.constant dense<0.000000e+00> : vector<1x16xf32>
    %29 = vector.multi_reduction <add>, %26, %cst_14 [2] : vector<1x16x128xf32> to vector<1x16xf32>
    %30 = vector.shape_cast %29 : vector<1x16xf32> to vector<1x16x1xf32>
    %31 = arith.addf %28, %30 : vector<1x16x1xf32>
    %c0_15 = arith.constant 0 : index
    %c0_16 = arith.constant 0 : index
    %c0_17 = arith.constant 0 : index
    %32 = vector.load %arg12[%c0_15, %c0_16, %c0_17] : memref<1x16x1xf32, #tpu.memory_space<vmem>>, vector<1x16x1xf32>
    tpu.vector_store %arg12[%c0_15, %c0_16, %c0_17], %31 {strides = array<i32>} : memref<1x16x1xf32, #tpu.memory_space<vmem>>, vector<1x16x1xf32>,
    %33 = arith.truncf %26 : vector<1x16x128xf32> to vector<1x16x128xbf16>
    %cst_18 = arith.constant dense<0.000000e+00> : vector<1x16x128xf32>
    %34 = tpu.matmul %33, %6, %cst_18 {dimension_numbers = #tpu.dot_dimension_numbers<[2], [1], [1], [2], [0, 0, 0, 1, 1, 2], [0], [0]>} : vector<1x16x128xbf16>, vector<1x128x128xbf16>, vector<1x16x128xf32> -> vector<1x16x128xf32>
    %c0_19 = arith.constant 0 : index
    %c0_20 = arith.constant 0 : index
    %c0_21 = arith.constant 0 : index
    %35 = vector.load %arg13[%c0_19, %c0_20, %c0_21] : memref<1x16x128xf32, #tpu.memory_space<vmem>>, vector<1x16x128xf32>
    %36 = vector.broadcast %23 : vector<1x16x1xf32> to vector<1x16x128xf32>
    %37 = arith.mulf %36, %35 : vector<1x16x128xf32>
    %38 = arith.addf %37, %34 : vector<1x16x128xf32>
    %c0_22 = arith.constant 0 : index
    %c0_23 = arith.constant 0 : index
    %c0_24 = arith.constant 0 : index
    %39 = vector.load %arg13[%c0_22, %c0_23, %c0_24] : memref<1x16x128xf32, #tpu.memory_space<vmem>>, vector<1x16x128xf32>
    tpu.vector_store %arg13[%c0_22, %c0_23, %c0_24], %38 {strides = array<i32>} : memref<1x16x128xf32, #tpu.memory_space<vmem>>, vector<1x16x128xf32>,
    %c0_25 = arith.constant 0 : index
    %c0_26 = arith.constant 0 : index
    %c0_27 = arith.constant 0 : index
    %40 = vector.load %arg11[%c0_25, %c0_26, %c0_27] : memref<1x16x1xf32, #tpu.memory_space<vmem>>, vector<1x16x1xf32>
    tpu.vector_store %arg11[%c0_25, %c0_26, %c0_27], %21 {strides = array<i32>} : memref<1x16x1xf32, #tpu.memory_space<vmem>>, vector<1x16x1xf32>,
    %c0_i32_28 = arith.constant 0 : i32
    %41 = arith.cmpi eq, %arg1, %c0_i32_28 : i32
    %42 = arith.extui %41 : i1 to i32
    %c0_i32_29 = arith.constant 0 : i32
    %43 = arith.cmpi ne, %42, %c0_i32_29 : i32
    scf.if %43 {
      %c0_30 = arith.constant 0 : index
      %c0_31 = arith.constant 0 : index
      %c0_32 = arith.constant 0 : index
      %44 = vector.load %arg12[%c0_30, %c0_31, %c0_32] : memref<1x16x1xf32, #tpu.memory_space<vmem>>, vector<1x16x1xf32>
      %45 = tpu.reciprocal %44 : vector<1x16x1xf32> -> vector<1x16x1xf32>
      %c0_33 = arith.constant 0 : index
      %c0_34 = arith.constant 0 : index
      %c0_35 = arith.constant 0 : index
      %46 = vector.load %arg13[%c0_33, %c0_34, %c0_35] : memref<1x16x128xf32, #tpu.memory_space<vmem>>, vector<1x16x128xf32>
      %47 = vector.broadcast %45 : vector<1x16x1xf32> to vector<1x16x128xf32>
      %48 = arith.mulf %46, %47 : vector<1x16x128xf32>
      %49 = vector.shape_cast %3 : vector<1x16x128xf32> to vector<16x128xf32>
      %50 = vector.shape_cast %4 : vector<1x16x128xbf16> to vector<16x128xbf16>
      %51 = vector.shape_cast %48 : vector<1x16x128xf32> to vector<16x128xf32>
      %52 = arith.truncf %51 : vector<16x128xf32> to vector<16x128xbf16>
      %c0_36 = arith.constant 0 : index
      %c0_37 = arith.constant 0 : index
      %53 = vector.load %arg5[%c0_36, %c0_37] : memref<128x128xf32, #tpu.memory_space<vmem>>, vector<128x128xf32>
      %54 = arith.truncf %53 : vector<128x128xf32> to vector<128x128xbf16>
      %cst_38 = arith.constant dense<0.000000e+00> : vector<16x128xf32>
      %55 = tpu.matmul %50, %54, %cst_38 {dimension_numbers = #tpu.dot_dimension_numbers<[1], [0], [0], [1], [0, 0, 1, 1], [], []>} : vector<16x128xbf16>, vector<128x128xbf16>, vector<16x128xf32> -> vector<16x128xf32>
      %c0_39 = arith.constant 0 : index
      %c0_40 = arith.constant 0 : index
      %56 = vector.load %arg6[%c0_39, %c0_40] : memref<1x128xf32, #tpu.memory_space<vmem>>, vector<1x128xf32>
      %57 = vector.broadcast %56 : vector<1x128xf32> to vector<16x128xf32>
      %58 = arith.addf %55, %57 : vector<16x128xf32>
      %59 = arith.negf %58 : vector<16x128xf32>
      %60 = math.exp %59 : vector<16x128xf32>
      %cst_41 = arith.constant 1.000000e+00 : f32
      %61 = vector.broadcast %cst_41 : f32 to vector<16x128xf32>
      %62 = arith.addf %61, %60 : vector<16x128xf32>
      %63 = arith.divf %61, %62 : vector<16x128xf32>
      %c0_42 = arith.constant 0 : index
      %c0_43 = arith.constant 0 : index
      %64 = vector.load %arg7[%c0_42, %c0_43] : memref<128x128xf32, #tpu.memory_space<vmem>>, vector<128x128xf32>
      %65 = arith.truncf %64 : vector<128x128xf32> to vector<128x128xbf16>
      %cst_44 = arith.constant dense<0.000000e+00> : vector<16x128xf32>
      %66 = tpu.matmul %52, %65, %cst_44 {dimension_numbers = #tpu.dot_dimension_numbers<[1], [0], [0], [1], [0, 0, 1, 1], [], []>} : vector<16x128xbf16>, vector<128x128xbf16>, vector<16x128xf32> -> vector<16x128xf32>
      %c0_45 = arith.constant 0 : index
      %c0_46 = arith.constant 0 : index
      %67 = vector.load %arg8[%c0_45, %c0_46] : memref<128x128xf32, #tpu.memory_space<vmem>>, vector<128x128xf32>
      %68 = arith.truncf %67 : vector<128x128xf32> to vector<128x128xbf16>
      %cst_47 = arith.constant dense<0.000000e+00> : vector<16x128xf32>
      %69 = tpu.matmul %50, %68, %cst_47 {dimension_numbers = #tpu.dot_dimension_numbers<[1], [0], [0], [1], [0, 0, 1, 1], [], []>} : vector<16x128xbf16>, vector<128x128xbf16>, vector<16x128xf32> -> vector<16x128xf32>
      %70 = arith.addf %66, %69 : vector<16x128xf32>
      %c0_48 = arith.constant 0 : index
      %c0_49 = arith.constant 0 : index
      %71 = vector.load %arg9[%c0_48, %c0_49] : memref<1x128xf32, #tpu.memory_space<vmem>>, vector<1x128xf32>
      %72 = vector.broadcast %71 : vector<1x128xf32> to vector<16x128xf32>
      %73 = arith.addf %70, %72 : vector<16x128xf32>
      %74 = math.tanh %73 : vector<16x128xf32>
      %c0_50 = arith.constant 0 : index
      %c0_51 = arith.constant 0 : index
      %c0_52 = arith.constant 0 : index
      %75 = vector.load %arg4[%c0_50, %c0_51, %c0_52] : memref<1x16x1xf32, #tpu.memory_space<vmem>>, vector<1x16x1xf32>
      %76 = vector.shape_cast %75 : vector<1x16x1xf32> to vector<16x1xf32>
      %77 = vector.broadcast %76 : vector<16x1xf32> to vector<16x128xf32>
      %78 = arith.mulf %74, %77 : vector<16x128xf32>
      %79 = arith.subf %78, %49 : vector<16x128xf32>
      %80 = arith.mulf %63, %79 : vector<16x128xf32>
      %81 = arith.addf %49, %80 : vector<16x128xf32>
      %82 = vector.shape_cast %81 : vector<16x128xf32> to vector<1x16x128xf32>
      %c0_53 = arith.constant 0 : index
      %c0_54 = arith.constant 0 : index
      %c0_55 = arith.constant 0 : index
      %83 = vector.load %arg10[%c0_53, %c0_54, %c0_55] : memref<1x16x128xf32, #tpu.memory_space<vmem>>, vector<1x16x128xf32>
      tpu.vector_store %arg10[%c0_53, %c0_54, %c0_55], %82 {strides = array<i32>} : memref<1x16x128xf32, #tpu.memory_space<vmem>>, vector<1x16x128xf32>,
    } else {
    }
    return
  }
  func.func @transform_0(%arg0: i32, %arg1: i32) -> (i32, i32, i32) {
    %c0_i32 = arith.constant 0 : i32
    %c0_i32_0 = arith.constant 0 : i32
    %c0_i32_1 = arith.constant 0 : i32
    return %arg0, %c0_i32, %c0_i32_0 : i32, i32, i32
  }
  func.func @transform_1(%arg0: i32, %arg1: i32) -> (i32, i32, i32) {
    %c0_i32 = arith.constant 0 : i32
    %c0_i32_0 = arith.constant 0 : i32
    return %arg0, %arg1, %c0_i32 : i32, i32, i32
  }
  func.func @transform_2(%arg0: i32, %arg1: i32) -> (i32, i32, i32) {
    %c0_i32 = arith.constant 0 : i32
    %c0_i32_0 = arith.constant 0 : i32
    %c0_i32_1 = arith.constant 0 : i32
    return %arg0, %c0_i32, %c0_i32_0 : i32, i32, i32
  }
  func.func @transform_3(%arg0: i32, %arg1: i32) -> (i32, i32) {
    %c0_i32 = arith.constant 0 : i32
    %c0_i32_0 = arith.constant 0 : i32
    %c0_i32_1 = arith.constant 0 : i32
    return %c0_i32, %c0_i32_0 : i32, i32
  }
  func.func @transform_4(%arg0: i32, %arg1: i32) -> (i32, i32) {
    %c0_i32 = arith.constant 0 : i32
    %c0_i32_0 = arith.constant 0 : i32
    %c0_i32_1 = arith.constant 0 : i32
    return %c0_i32, %c0_i32_0 : i32, i32
  }
  func.func @transform_5(%arg0: i32, %arg1: i32) -> (i32, i32) {
    %c0_i32 = arith.constant 0 : i32
    %c0_i32_0 = arith.constant 0 : i32
    %c0_i32_1 = arith.constant 0 : i32
    return %c0_i32, %c0_i32_0 : i32, i32
  }
  func.func @transform_6(%arg0: i32, %arg1: i32) -> (i32, i32) {
    %c0_i32 = arith.constant 0 : i32
    %c0_i32_0 = arith.constant 0 : i32
    %c0_i32_1 = arith.constant 0 : i32
    return %c0_i32, %c0_i32_0 : i32, i32
  }
  func.func @transform_7(%arg0: i32, %arg1: i32) -> (i32, i32) {
    %c0_i32 = arith.constant 0 : i32
    %c0_i32_0 = arith.constant 0 : i32
    %c0_i32_1 = arith.constant 0 : i32
    return %c0_i32, %c0_i32_0 : i32, i32
  }
  func.func @transform_8(%arg0: i32, %arg1: i32) -> (i32, i32, i32) {
    %c0_i32 = arith.constant 0 : i32
    %c0_i32_0 = arith.constant 0 : i32
    %c0_i32_1 = arith.constant 0 : i32
    return %arg0, %c0_i32, %c0_i32_0 : i32, i32, i32
  }
}

module attributes {stable_mosaic.version = 11 : i64} {
  func.func @_cpt_as_kernel(%arg0: i32, %arg1: i32, %arg2: memref<1x16x128xf32, #tpu.memory_space<vmem>>, %arg3: memref<1x128x128xf32, #tpu.memory_space<vmem>>, %arg4: memref<1x16x1xf32, #tpu.memory_space<vmem>>, %arg5: memref<128x128xf32, #tpu.memory_space<vmem>>, %arg6: memref<1x128xf32, #tpu.memory_space<vmem>>, %arg7: memref<128x128xf32, #tpu.memory_space<vmem>>, %arg8: memref<128x128xf32, #tpu.memory_space<vmem>>, %arg9: memref<1x128xf32, #tpu.memory_space<vmem>>, %arg10: memref<1x16x128xf32, #tpu.memory_space<vmem>>, %arg11: memref<1x16x1xf32, #tpu.memory_space<vmem>>, %arg12: memref<1x16x1xf32, #tpu.memory_space<vmem>>, %arg13: memref<1x16x128xf32, #tpu.memory_space<vmem>>) attributes {dimension_semantics = [#tpu.dimension_semantics<parallel>, #tpu.dimension_semantics<arbitrary>], iteration_bounds = array<i64: 2, 1>, scalar_prefetch = 0 : i64, scratch_operands = 3 : i64, tpu.core_type = #tpu.core_type<tc>, window_params = [{transform_indices = @transform_0, window_bounds = array<i64: 1, 16, 128>}, {transform_indices = @transform_1, window_bounds = array<i64: 1, 128, 128>}, {transform_indices = @transform_2, window_bounds = array<i64: 1, 16, 1>}, {pipeline_mode = #tpu.pipeline_mode<synchronous>, transform_indices = @transform_3, window_bounds = array<i64: 128, 128>}, {pipeline_mode = #tpu.pipeline_mode<synchronous>, transform_indices = @transform_4, window_bounds = array<i64: 1, 128>}, {pipeline_mode = #tpu.pipeline_mode<synchronous>, transform_indices = @transform_5, window_bounds = array<i64: 128, 128>}, {pipeline_mode = #tpu.pipeline_mode<synchronous>, transform_indices = @transform_6, window_bounds = array<i64: 128, 128>}, {pipeline_mode = #tpu.pipeline_mode<synchronous>, transform_indices = @transform_7, window_bounds = array<i64: 1, 128>}, {transform_indices = @transform_8, window_bounds = array<i64: 1, 16, 128>}]} {
    %c0_i32 = arith.constant 0 : i32
    %0 = arith.cmpi eq, %arg1, %c0_i32 : i32
    %1 = arith.extui %0 : i1 to i32
    %c0_i32_0 = arith.constant 0 : i32
    %2 = arith.cmpi ne, %1, %c0_i32_0 : i32
    scf.if %2 {
      %cst_30 = arith.constant 0xFF800000 : f32
      %44 = vector.broadcast %cst_30 : f32 to vector<1x16x1xf32>
      %c0_31 = arith.constant 0 : index
      %c0_32 = arith.constant 0 : index
      %c0_33 = arith.constant 0 : index
      %45 = vector.load %arg11[%c0_31, %c0_32, %c0_33] : memref<1x16x1xf32, #tpu.memory_space<vmem>>, vector<1x16x1xf32>
      tpu.vector_store %arg11[%c0_31, %c0_32, %c0_33], %44 {strides = array<i32>} : memref<1x16x1xf32, #tpu.memory_space<vmem>>, vector<1x16x1xf32>,
      %cst_34 = arith.constant 0.000000e+00 : f32
      %46 = vector.broadcast %cst_34 : f32 to vector<1x16x1xf32>
      %c0_35 = arith.constant 0 : index
      %c0_36 = arith.constant 0 : index
      %c0_37 = arith.constant 0 : index
      %47 = vector.load %arg12[%c0_35, %c0_36, %c0_37] : memref<1x16x1xf32, #tpu.memory_space<vmem>>, vector<1x16x1xf32>
      tpu.vector_store %arg12[%c0_35, %c0_36, %c0_37], %46 {strides = array<i32>} : memref<1x16x1xf32, #tpu.memory_space<vmem>>, vector<1x16x1xf32>,
      %cst_38 = arith.constant 0.000000e+00 : f32
      %48 = vector.broadcast %cst_38 : f32 to vector<1x16x128xf32>
      %c0_39 = arith.constant 0 : index
      %c0_40 = arith.constant 0 : index
      %c0_41 = arith.constant 0 : index
      %49 = vector.load %arg13[%c0_39, %c0_40, %c0_41] : memref<1x16x128xf32, #tpu.memory_space<vmem>>, vector<1x16x128xf32>
      tpu.vector_store %arg13[%c0_39, %c0_40, %c0_41], %48 {strides = array<i32>} : memref<1x16x128xf32, #tpu.memory_space<vmem>>, vector<1x16x128xf32>,
    } else {
    }
    %c0 = arith.constant 0 : index
    %c0_1 = arith.constant 0 : index
    %c0_2 = arith.constant 0 : index
    %3 = vector.load %arg2[%c0, %c0_1, %c0_2] : memref<1x16x128xf32, #tpu.memory_space<vmem>>, vector<1x16x128xf32>
    %4 = arith.truncf %3 : vector<1x16x128xf32> to vector<1x16x128xbf16>
    %c0_3 = arith.constant 0 : index
    %c0_4 = arith.constant 0 : index
    %c0_5 = arith.constant 0 : index
    %5 = vector.load %arg3[%c0_3, %c0_4, %c0_5] : memref<1x128x128xf32, #tpu.memory_space<vmem>>, vector<1x128x128xf32>
    %6 = arith.truncf %5 : vector<1x128x128xf32> to vector<1x128x128xbf16>
    %cst = arith.constant dense<0.000000e+00> : vector<1x16x128xf32>
    %7 = tpu.matmul %4, %6, %cst {dimension_numbers = #tpu.dot_dimension_numbers<[2], [2], [1], [1], [0, 0, 0, 1, 1, 1], [0], [0]>} : vector<1x16x128xbf16>, vector<1x128x128xbf16>, vector<1x16x128xf32> -> vector<1x16x128xf32>
    %c128_i32 = arith.constant 128 : i32
    %8 = arith.muli %arg1, %c128_i32 : i32
    %9 = tpu.iota {dimensions = array<i32: 2>} : vector<1x1x128xi32>
    %10 = vector.broadcast %8 : i32 to vector<1x1x128xi32>
    %11 = arith.addi %10, %9 : vector<1x1x128xi32>
    %c8_i32 = arith.constant 8 : i32
    %12 = vector.broadcast %c8_i32 : i32 to vector<1x1x128xi32>
    %13 = arith.cmpi slt, %11, %12 : vector<1x1x128xi32>
    %cst_6 = arith.constant -1.000000e+30 : f32
    %14 = vector.shape_cast %13 : vector<1x1x128xi1> to vector<1x1x128xi1>
    %15 = vector.broadcast %14 : vector<1x1x128xi1> to vector<1x16x128xi1>
    %16 = vector.broadcast %cst_6 : f32 to vector<1x16x128xf32>
    %17 = arith.select %15, %7, %16 : vector<1x16x128xi1>, vector<1x16x128xf32>
    %c0_7 = arith.constant 0 : index
    %c0_8 = arith.constant 0 : index
    %c0_9 = arith.constant 0 : index
    %18 = vector.load %arg11[%c0_7, %c0_8, %c0_9] : memref<1x16x1xf32, #tpu.memory_space<vmem>>, vector<1x16x1xf32>
    %cst_10 = arith.constant dense<0xFF800000> : vector<1x16xf32>
    %19 = vector.multi_reduction <maximumf>, %17, %cst_10 [2] : vector<1x16x128xf32> to vector<1x16xf32>
    %20 = vector.shape_cast %19 : vector<1x16xf32> to vector<1x16x1xf32>
    %21 = arith.maximumf %18, %20 : vector<1x16x1xf32>
    %22 = arith.subf %18, %21 : vector<1x16x1xf32>
    %23 = math.exp %22 : vector<1x16x1xf32>
    %24 = vector.broadcast %21 : vector<1x16x1xf32> to vector<1x16x128xf32>
    %25 = arith.subf %17, %24 : vector<1x16x128xf32>
    %26 = math.exp %25 : vector<1x16x128xf32>
    %c0_11 = arith.constant 0 : index
    %c0_12 = arith.constant 0 : index
    %c0_13 = arith.constant 0 : index
    %27 = vector.load %arg12[%c0_11, %c0_12, %c0_13] : memref<1x16x1xf32, #tpu.memory_space<vmem>>, vector<1x16x1xf32>
    %28 = arith.mulf %23, %27 : vector<1x16x1xf32>
    %cst_14 = arith.constant dense<0.000000e+00> : vector<1x16xf32>
    %29 = vector.multi_reduction <add>, %26, %cst_14 [2] : vector<1x16x128xf32> to vector<1x16xf32>
    %30 = vector.shape_cast %29 : vector<1x16xf32> to vector<1x16x1xf32>
    %31 = arith.addf %28, %30 : vector<1x16x1xf32>
    %c0_15 = arith.constant 0 : index
    %c0_16 = arith.constant 0 : index
    %c0_17 = arith.constant 0 : index
    %32 = vector.load %arg12[%c0_15, %c0_16, %c0_17] : memref<1x16x1xf32, #tpu.memory_space<vmem>>, vector<1x16x1xf32>
    tpu.vector_store %arg12[%c0_15, %c0_16, %c0_17], %31 {strides = array<i32>} : memref<1x16x1xf32, #tpu.memory_space<vmem>>, vector<1x16x1xf32>,
    %33 = arith.truncf %26 : vector<1x16x128xf32> to vector<1x16x128xbf16>
    %cst_18 = arith.constant dense<0.000000e+00> : vector<1x16x128xf32>
    %34 = tpu.matmul %33, %6, %cst_18 {dimension_numbers = #tpu.dot_dimension_numbers<[2], [1], [1], [2], [0, 0, 0, 1, 1, 2], [0], [0]>} : vector<1x16x128xbf16>, vector<1x128x128xbf16>, vector<1x16x128xf32> -> vector<1x16x128xf32>
    %c0_19 = arith.constant 0 : index
    %c0_20 = arith.constant 0 : index
    %c0_21 = arith.constant 0 : index
    %35 = vector.load %arg13[%c0_19, %c0_20, %c0_21] : memref<1x16x128xf32, #tpu.memory_space<vmem>>, vector<1x16x128xf32>
    %36 = vector.broadcast %23 : vector<1x16x1xf32> to vector<1x16x128xf32>
    %37 = arith.mulf %36, %35 : vector<1x16x128xf32>
    %38 = arith.addf %37, %34 : vector<1x16x128xf32>
    %c0_22 = arith.constant 0 : index
    %c0_23 = arith.constant 0 : index
    %c0_24 = arith.constant 0 : index
    %39 = vector.load %arg13[%c0_22, %c0_23, %c0_24] : memref<1x16x128xf32, #tpu.memory_space<vmem>>, vector<1x16x128xf32>
    tpu.vector_store %arg13[%c0_22, %c0_23, %c0_24], %38 {strides = array<i32>} : memref<1x16x128xf32, #tpu.memory_space<vmem>>, vector<1x16x128xf32>,
    %c0_25 = arith.constant 0 : index
    %c0_26 = arith.constant 0 : index
    %c0_27 = arith.constant 0 : index
    %40 = vector.load %arg11[%c0_25, %c0_26, %c0_27] : memref<1x16x1xf32, #tpu.memory_space<vmem>>, vector<1x16x1xf32>
    tpu.vector_store %arg11[%c0_25, %c0_26, %c0_27], %21 {strides = array<i32>} : memref<1x16x1xf32, #tpu.memory_space<vmem>>, vector<1x16x1xf32>,
    %c0_i32_28 = arith.constant 0 : i32
    %41 = arith.cmpi eq, %arg1, %c0_i32_28 : i32
    %42 = arith.extui %41 : i1 to i32
    %c0_i32_29 = arith.constant 0 : i32
    %43 = arith.cmpi ne, %42, %c0_i32_29 : i32
    scf.if %43 {
      %c0_30 = arith.constant 0 : index
      %c0_31 = arith.constant 0 : index
      %c0_32 = arith.constant 0 : index
      %44 = vector.load %arg12[%c0_30, %c0_31, %c0_32] : memref<1x16x1xf32, #tpu.memory_space<vmem>>, vector<1x16x1xf32>
      %45 = tpu.reciprocal %44 : vector<1x16x1xf32> -> vector<1x16x1xf32>
      %c0_33 = arith.constant 0 : index
      %c0_34 = arith.constant 0 : index
      %c0_35 = arith.constant 0 : index
      %46 = vector.load %arg13[%c0_33, %c0_34, %c0_35] : memref<1x16x128xf32, #tpu.memory_space<vmem>>, vector<1x16x128xf32>
      %47 = vector.broadcast %45 : vector<1x16x1xf32> to vector<1x16x128xf32>
      %48 = arith.mulf %46, %47 : vector<1x16x128xf32>
      %49 = vector.shape_cast %3 : vector<1x16x128xf32> to vector<16x128xf32>
      %50 = vector.shape_cast %4 : vector<1x16x128xbf16> to vector<16x128xbf16>
      %51 = vector.shape_cast %48 : vector<1x16x128xf32> to vector<16x128xf32>
      %52 = arith.truncf %51 : vector<16x128xf32> to vector<16x128xbf16>
      %c0_36 = arith.constant 0 : index
      %c0_37 = arith.constant 0 : index
      %53 = vector.load %arg5[%c0_36, %c0_37] : memref<128x128xf32, #tpu.memory_space<vmem>>, vector<128x128xf32>
      %54 = arith.truncf %53 : vector<128x128xf32> to vector<128x128xbf16>
      %cst_38 = arith.constant dense<0.000000e+00> : vector<16x128xf32>
      %55 = tpu.matmul %50, %54, %cst_38 {dimension_numbers = #tpu.dot_dimension_numbers<[1], [0], [0], [1], [0, 0, 1, 1], [], []>} : vector<16x128xbf16>, vector<128x128xbf16>, vector<16x128xf32> -> vector<16x128xf32>
      %c0_39 = arith.constant 0 : index
      %c0_40 = arith.constant 0 : index
      %56 = vector.load %arg6[%c0_39, %c0_40] : memref<1x128xf32, #tpu.memory_space<vmem>>, vector<1x128xf32>
      %57 = vector.broadcast %56 : vector<1x128xf32> to vector<16x128xf32>
      %58 = arith.addf %55, %57 : vector<16x128xf32>
      %59 = arith.negf %58 : vector<16x128xf32>
      %60 = math.exp %59 : vector<16x128xf32>
      %cst_41 = arith.constant 1.000000e+00 : f32
      %61 = vector.broadcast %cst_41 : f32 to vector<16x128xf32>
      %62 = arith.addf %61, %60 : vector<16x128xf32>
      %63 = arith.divf %61, %62 : vector<16x128xf32>
      %c0_42 = arith.constant 0 : index
      %c0_43 = arith.constant 0 : index
      %64 = vector.load %arg7[%c0_42, %c0_43] : memref<128x128xf32, #tpu.memory_space<vmem>>, vector<128x128xf32>
      %65 = arith.truncf %64 : vector<128x128xf32> to vector<128x128xbf16>
      %cst_44 = arith.constant dense<0.000000e+00> : vector<16x128xf32>
      %66 = tpu.matmul %52, %65, %cst_44 {dimension_numbers = #tpu.dot_dimension_numbers<[1], [0], [0], [1], [0, 0, 1, 1], [], []>} : vector<16x128xbf16>, vector<128x128xbf16>, vector<16x128xf32> -> vector<16x128xf32>
      %c0_45 = arith.constant 0 : index
      %c0_46 = arith.constant 0 : index
      %67 = vector.load %arg8[%c0_45, %c0_46] : memref<128x128xf32, #tpu.memory_space<vmem>>, vector<128x128xf32>
      %68 = arith.truncf %67 : vector<128x128xf32> to vector<128x128xbf16>
      %cst_47 = arith.constant dense<0.000000e+00> : vector<16x128xf32>
      %69 = tpu.matmul %50, %68, %cst_47 {dimension_numbers = #tpu.dot_dimension_numbers<[1], [0], [0], [1], [0, 0, 1, 1], [], []>} : vector<16x128xbf16>, vector<128x128xbf16>, vector<16x128xf32> -> vector<16x128xf32>
      %70 = arith.addf %66, %69 : vector<16x128xf32>
      %c0_48 = arith.constant 0 : index
      %c0_49 = arith.constant 0 : index
      %71 = vector.load %arg9[%c0_48, %c0_49] : memref<1x128xf32, #tpu.memory_space<vmem>>, vector<1x128xf32>
      %72 = vector.broadcast %71 : vector<1x128xf32> to vector<16x128xf32>
      %73 = arith.addf %70, %72 : vector<16x128xf32>
      %74 = math.tanh %73 : vector<16x128xf32>
      %c0_50 = arith.constant 0 : index
      %c0_51 = arith.constant 0 : index
      %c0_52 = arith.constant 0 : index
      %75 = vector.load %arg4[%c0_50, %c0_51, %c0_52] : memref<1x16x1xf32, #tpu.memory_space<vmem>>, vector<1x16x1xf32>
      %76 = vector.shape_cast %75 : vector<1x16x1xf32> to vector<16x1xf32>
      %77 = vector.broadcast %76 : vector<16x1xf32> to vector<16x128xf32>
      %78 = arith.mulf %74, %77 : vector<16x128xf32>
      %79 = arith.subf %78, %49 : vector<16x128xf32>
      %80 = arith.mulf %63, %79 : vector<16x128xf32>
      %81 = arith.addf %49, %80 : vector<16x128xf32>
      %82 = vector.shape_cast %81 : vector<16x128xf32> to vector<1x16x128xf32>
      %c0_53 = arith.constant 0 : index
      %c0_54 = arith.constant 0 : index
      %c0_55 = arith.constant 0 : index
      %83 = vector.load %arg10[%c0_53, %c0_54, %c0_55] : memref<1x16x128xf32, #tpu.memory_space<vmem>>, vector<1x16x128xf32>
      tpu.vector_store %arg10[%c0_53, %c0_54, %c0_55], %82 {strides = array<i32>} : memref<1x16x128xf32, #tpu.memory_space<vmem>>, vector<1x16x128xf32>,
    } else {
    }
    return
  }
  func.func @transform_0(%arg0: i32, %arg1: i32) -> (i32, i32, i32) {
    %c0_i32 = arith.constant 0 : i32
    %c0_i32_0 = arith.constant 0 : i32
    %c0_i32_1 = arith.constant 0 : i32
    return %arg0, %c0_i32, %c0_i32_0 : i32, i32, i32
  }
  func.func @transform_1(%arg0: i32, %arg1: i32) -> (i32, i32, i32) {
    %c0_i32 = arith.constant 0 : i32
    %c0_i32_0 = arith.constant 0 : i32
    return %arg0, %arg1, %c0_i32 : i32, i32, i32
  }
  func.func @transform_2(%arg0: i32, %arg1: i32) -> (i32, i32, i32) {
    %c0_i32 = arith.constant 0 : i32
    %c0_i32_0 = arith.constant 0 : i32
    %c0_i32_1 = arith.constant 0 : i32
    return %arg0, %c0_i32, %c0_i32_0 : i32, i32, i32
  }
  func.func @transform_3(%arg0: i32, %arg1: i32) -> (i32, i32) {
    %c0_i32 = arith.constant 0 : i32
    %c0_i32_0 = arith.constant 0 : i32
    %c0_i32_1 = arith.constant 0 : i32
    return %c0_i32, %c0_i32_0 : i32, i32
  }
  func.func @transform_4(%arg0: i32, %arg1: i32) -> (i32, i32) {
    %c0_i32 = arith.constant 0 : i32
    %c0_i32_0 = arith.constant 0 : i32
    %c0_i32_1 = arith.constant 0 : i32
    return %c0_i32, %c0_i32_0 : i32, i32
  }
  func.func @transform_5(%arg0: i32, %arg1: i32) -> (i32, i32) {
    %c0_i32 = arith.constant 0 : i32
    %c0_i32_0 = arith.constant 0 : i32
    %c0_i32_1 = arith.constant 0 : i32
    return %c0_i32, %c0_i32_0 : i32, i32
  }
  func.func @transform_6(%arg0: i32, %arg1: i32) -> (i32, i32) {
    %c0_i32 = arith.constant 0 : i32
    %c0_i32_0 = arith.constant 0 : i32
    %c0_i32_1 = arith.constant 0 : i32
    return %c0_i32, %c0_i32_0 : i32, i32
  }
  func.func @transform_7(%arg0: i32, %arg1: i32) -> (i32, i32) {
    %c0_i32 = arith.constant 0 : i32
    %c0_i32_0 = arith.constant 0 : i32
    %c0_i32_1 = arith.constant 0 : i32
    return %c0_i32, %c0_i32_0 : i32, i32
  }
  func.func @transform_8(%arg0: i32, %arg1: i32) -> (i32, i32, i32) {
    %c0_i32 = arith.constant 0 : i32
    %c0_i32_0 = arith.constant 0 : i32
    %c0_i32_1 = arith.constant 0 : i32
    return %arg0, %c0_i32, %c0_i32_0 : i32, i32, i32
  }
}

</mosaic_0001>

<llo_original>
// kernel: tpu_custom_call.1
$region0: #{tpu_custom_call.1}
  #allocation0 [shape = 'u32[]', space=smem, size = 0x4, offset = 0x4, fixed_abs, tag = 'smem constant byte address 0x4 - core index']
  #allocation1 [shape = 'u32[144,128]{1,0:T(1,128)}', space=vmem, size = 0x12000, scoped, tag = 'internal scratch']
  #allocation2 [shape = 'f32[1,16,1]{2,1,0:T(8,128)}', space=vmem, size = 0x2000, scoped, tag = 'scratch operand']
  #allocation3 [shape = 'f32[1,16,1]{2,1,0:T(8,128)}', space=vmem, size = 0x2000, scoped, tag = 'scratch operand']
  #allocation4 [shape = 'f32[1,16,128]{2,1,0:T(8,128)}', space=vmem, size = 0x2000, scoped, tag = 'scratch operand']
  %s0 = inlined_call_operand.vmem [shape: f32[2,16,128], index: 0, kind: input, shape index: {}]
  %s1 = inlined_call_operand.hbm [shape: f32[2,128,128], index: 1, kind: input, shape index: {}]
  %s2 = inlined_call_operand.vmem [shape: f32[2,16,1], index: 2, kind: input, shape index: {}]
  %s3 = inlined_call_operand.hbm [shape: f32[128,128], index: 3, kind: input, shape index: {}]
  %s4 = inlined_call_operand.vmem [shape: f32[1,128], index: 4, kind: input, shape index: {}]
  %s5 = inlined_call_operand.hbm [shape: f32[128,128], index: 5, kind: input, shape index: {}]
  %s6 = inlined_call_operand.hbm [shape: f32[128,128], index: 6, kind: input, shape index: {}]
  %s7 = inlined_call_operand.vmem [shape: f32[1,128], index: 7, kind: input, shape index: {}]
  %s8 = inlined_call_operand.hbm [shape: f32[2,16,128], index: 8, kind: output, shape index: {}]
  %s9 = sld [smem:[#allocation0]]
  $region89: #{tpu_custom_call.1} parent=0
    _
  %s11 = ssub.s32 1, %s9
  %s12 = scalar_select 0, %s11, %s9
  $region1: #{tpu_custom_call.1} parent=0
    #allocation5 [shape = 'u8[131072]{0}', space=vmem, size = 0x20000, scoped, tag = 'input window, operand 1']
    #allocation6 [shape = 's32[2]{0}', space=sflag, size = 0x8, scoped, tag = 'scoped memory for tpu_custom_call.1']
    #allocation7 [shape = 's32[2]{0}', space=sflag, size = 0x8, scoped, tag = 'scoped memory for tpu_custom_call.1']
    #allocation8 [shape = 'u8[65536]{0}', space=vmem, size = 0x10000, scoped, tag = 'input window, operand 3, single buffered']
    #allocation9 [shape = 's32[1]{0}', space=sflag, size = 0x4, scoped, tag = 'scoped memory for tpu_custom_call.1']
    #allocation10 [shape = 'u8[65536]{0}', space=vmem, size = 0x10000, scoped, tag = 'input window, operand 5, single buffered']
    #allocation11 [shape = 'u8[65536]{0}', space=vmem, size = 0x10000, scoped, tag = 'input window, operand 6, single buffered']
    #allocation12 [shape = 's32[1]{0}', space=sflag, size = 0x4, scoped, tag = 'scoped memory for tpu_custom_call.1']
    #allocation13 [shape = 'u8[16384]{0}', space=vmem, size = 0x4000, scoped, tag = 'output window, operand 0']
    %13 = vsyncpa [#allocation6], 0
    %s14 = scalar_lea.sflag [#allocation6], 1
    %15 = vsyncpa %s14, 0
    %16 = vsyncpa [#allocation9], 0
    %17 = vsyncpa [#allocation12], 0
    %18 = vsyncpa [#allocation7], 0
    %s19 = scalar_lea.sflag [#allocation7], 1
    %20 = vsyncpa %s19, 0
    loop: start=0, step=1, limit=4
    $region2: #{tpu_custom_call.1} parent=1 // loop_pre_header
      _
    $region3: #{tpu_custom_call.1} parent=1 // loop_header
      %s22 = sphi 0, %s26
      %p23 = scmp.ge.s32.totalorder %s22, 4
      %s29 = sphi 0, %s41
      %s30 = sphi 0, %s37
      %s31 = sphi 0, %s29
      %s32 = sphi 0, %s30
      %s33 = sphi 0, %s31
      %s34 = sphi 0, %s32
      %s44 = sphi 0, %s46
      %s47 = sphi 0, %s44
      %s48 = sphi 0, %s47
      %s64 = sphi 0, %s48
      %s72 = sphi 0, %s74
      %s75 = sphi 0, %s72
      %s76 = sphi 0, %s75
      %s92 = sphi 0, %s76
      %s98 = sphi 0, %s100
      %s101 = sphi 0, %s98
      %s102 = sphi 0, %s101
      %s118 = sphi 0, %s102
      %s122 = sphi 0, %s122
      %s124 = sphi 0, %s122
      %s125 = sphi 0, %s124
      %s139 = sphi 0, %s125
      %s143 = sphi 0, %s143
      %s145 = sphi 0, %s143
      %s146 = sphi 0, %s145
      %s160 = sphi 0, %s146
      %s164 = sphi 0, %s164
      %s166 = sphi 0, %s164
      %s167 = sphi 0, %s166
      %s181 = sphi 0, %s167
      %s185 = sphi 0, %s185
      %s187 = sphi 0, %s185
      %s188 = sphi 0, %s187
      %s202 = sphi 0, %s188
      %s206 = sphi 0, %s206
      %s208 = sphi 0, %s206
      %s209 = sphi 0, %s208
      %s223 = sphi 0, %s209
      %s229 = sphi 0, %s231
      %s232 = sphi 0, %s229
      %s233 = sphi 0, %s232
      %s249 = sphi 0, %s233
    $region4: #{tpu_custom_call.1} parent=1 // loop_header_branch
      %25 = sbr.rel (%p23) target = $region8
    $region5: #{tpu_custom_call.1} parent=1 // loop_body
      %s27 = ssub.s32 %s22, 1
      %s28 = ssub.s32 %s22, 2
      %s35 = sadd.s32 1, %s30
      %p36 = scmp.ge.s32.totalorder %s35, 1
      %s37 = scalar_select %p36, 0, %s35
      %s38 = sadd.s32 1, %s29
      %s39 = scalar_select %p36, %s38, %s29
      %p40 = scmp.ge.s32.totalorder %s39, 2
      %s41 = scalar_select %p40, 0, %s39
      %s42 = ssub.s32 %s29, %s41
      %p43 = scmp.eq.s32.totalorder %s42, 0
      %s45 = sadd.s32 %s44, 1
      %s46 = scalar_select %p43, %s44, %s45
      %p49 = pneg %p43
      %p50 = scmp.eq.s32.totalorder %s22, 1
      %p51 = por %p49, %p50
      %p52 = scmp.ne.s32.totalorder %s44, %s47
      %p53 = scmp.eq.s32.totalorder %s22, 0
      %p54 = por %p52, %p53
      %p55 = scmp.ne.s32.totalorder %s44, %s47
      %p56 = scmp.eq.s32.totalorder %s27, 1
      %p57 = por %p55, %p56
      %p58 = scmp.ne.s32.totalorder %s47, %s48
      %p59 = scmp.eq.s32.totalorder %s27, 0
      %p60 = por %p58, %p59
      %p61 = scmp.ne.s32.totalorder %s47, %s48
      %p62 = scmp.eq.s32.totalorder %s28, 1
      %p63 = por %p61, %p62
      %p65 = scmp.ne.s32.totalorder %s48, %s64
      %p66 = scmp.eq.s32.totalorder %s28, 0
      %p67 = por %p65, %p66
      %s68 = ssub.s32 %s29, %s41
      %s69 = ssub.s32 %s30, %s37
      %s70 = sor.u32 %s68, %s69
      %p71 = scmp.eq.s32.totalorder %s70, 0
      %s73 = sadd.s32 %s72, 1
      %s74 = scalar_select %p71, %s72, %s73
      %p77 = pneg %p71
      %p78 = scmp.eq.s32.totalorder %s22, 1
      %p79 = por %p77, %p78
      %p80 = scmp.ne.s32.totalorder %s72, %s75
      %p81 = scmp.eq.s32.totalorder %s22, 0
      %p82 = por %p80, %p81
      %p83 = scmp.ne.s32.totalorder %s72, %s75
      %p84 = scmp.eq.s32.totalorder %s27, 1
      %p85 = por %p83, %p84
      %p86 = scmp.ne.s32.totalorder %s75, %s76
      %p87 = scmp.eq.s32.totalorder %s27, 0
      %p88 = por %p86, %p87
      %p89 = scmp.ne.s32.totalorder %s75, %s76
      %p90 = scmp.eq.s32.totalorder %s28, 1
      %p91 = por %p89, %p90
      %p93 = scmp.ne.s32.totalorder %s76, %s92
      %p94 = scmp.eq.s32.totalorder %s28, 0
      %p95 = por %p93, %p94
      %s96 = ssub.s32 %s29, %s41
      %p97 = scmp.eq.s32.totalorder %s96, 0
      %s99 = sadd.s32 %s98, 1
      %s100 = scalar_select %p97, %s98, %s99
      %p103 = pneg %p97
      %p104 = scmp.eq.s32.totalorder %s22, 1
      %p105 = por %p103, %p104
      %p106 = scmp.ne.s32.totalorder %s98, %s101
      %p107 = scmp.eq.s32.totalorder %s22, 0
      %p108 = por %p106, %p107
      %p109 = scmp.ne.s32.totalorder %s98, %s101
      %p110 = scmp.eq.s32.totalorder %s27, 1
      %p111 = por %p109, %p110
      %p112 = scmp.ne.s32.totalorder %s101, %s102
      %p113 = scmp.eq.s32.totalorder %s27, 0
      %p114 = por %p112, %p113
      %p115 = scmp.ne.s32.totalorder %s101, %s102
      %p116 = scmp.eq.s32.totalorder %s28, 1
      %p117 = por %p115, %p116
      %p119 = scmp.ne.s32.totalorder %s102, %s118
      %p120 = scmp.eq.s32.totalorder %s28, 0
      %p121 = por %p119, %p120
      %s123 = sadd.s32 %s122, 1
      %p126 = scmp.eq.s32.totalorder %s22, 1
      %p127 = scmp.ne.s32.totalorder %s122, %s124
      %p128 = scmp.eq.s32.totalorder %s22, 0
      %p129 = por %p127, %p128
      %p130 = scmp.ne.s32.totalorder %s122, %s124
      %p131 = scmp.eq.s32.totalorder %s27, 1
      %p132 = por %p130, %p131
      %p133 = scmp.ne.s32.totalorder %s124, %s125
      %p134 = scmp.eq.s32.totalorder %s27, 0
      %p135 = por %p133, %p134
      %p136 = scmp.ne.s32.totalorder %s124, %s125
      %p137 = scmp.eq.s32.totalorder %s28, 1
      %p138 = por %p136, %p137
      %p140 = scmp.ne.s32.totalorder %s125, %s139
      %p141 = scmp.eq.s32.totalorder %s28, 0
      %p142 = por %p140, %p141
      %s144 = sadd.s32 %s143, 1
      %p147 = scmp.eq.s32.totalorder %s22, 1
      %p148 = scmp.ne.s32.totalorder %s143, %s145
      %p149 = scmp.eq.s32.totalorder %s22, 0
      %p150 = por %p148, %p149
      %p151 = scmp.ne.s32.totalorder %s143, %s145
      %p152 = scmp.eq.s32.totalorder %s27, 1
      %p153 = por %p151, %p152
      %p154 = scmp.ne.s32.totalorder %s145, %s146
      %p155 = scmp.eq.s32.totalorder %s27, 0
      %p156 = por %p154, %p155
      %p157 = scmp.ne.s32.totalorder %s145, %s146
      %p158 = scmp.eq.s32.totalorder %s28, 1
      %p159 = por %p157, %p158
      %p161 = scmp.ne.s32.totalorder %s146, %s160
      %p162 = scmp.eq.s32.totalorder %s28, 0
      %p163 = por %p161, %p162
      %s165 = sadd.s32 %s164, 1
      %p168 = scmp.eq.s32.totalorder %s22, 1
      %p169 = scmp.ne.s32.totalorder %s164, %s166
      %p170 = scmp.eq.s32.totalorder %s22, 0
      %p171 = por %p169, %p170
      %p172 = scmp.ne.s32.totalorder %s164, %s166
      %p173 = scmp.eq.s32.totalorder %s27, 1
      %p174 = por %p172, %p173
      %p175 = scmp.ne.s32.totalorder %s166, %s167
      %p176 = scmp.eq.s32.totalorder %s27, 0
      %p177 = por %p175, %p176
      %p178 = scmp.ne.s32.totalorder %s166, %s167
      %p179 = scmp.eq.s32.totalorder %s28, 1
      %p180 = por %p178, %p179
      %p182 = scmp.ne.s32.totalorder %s167, %s181
      %p183 = scmp.eq.s32.totalorder %s28, 0
      %p184 = por %p182, %p183
      %s186 = sadd.s32 %s185, 1
      %p189 = scmp.eq.s32.totalorder %s22, 1
      %p190 = scmp.ne.s32.totalorder %s185, %s187
      %p191 = scmp.eq.s32.totalorder %s22, 0
      %p192 = por %p190, %p191
      %p193 = scmp.ne.s32.totalorder %s185, %s187
      %p194 = scmp.eq.s32.totalorder %s27, 1
      %p195 = por %p193, %p194
      %p196 = scmp.ne.s32.totalorder %s187, %s188
      %p197 = scmp.eq.s32.totalorder %s27, 0
      %p198 = por %p196, %p197
      %p199 = scmp.ne.s32.totalorder %s187, %s188
      %p200 = scmp.eq.s32.totalorder %s28, 1
      %p201 = por %p199, %p200
      %p203 = scmp.ne.s32.totalorder %s188, %s202
      %p204 = scmp.eq.s32.totalorder %s28, 0
      %p205 = por %p203, %p204
      %s207 = sadd.s32 %s206, 1
      %p210 = scmp.eq.s32.totalorder %s22, 1
      %p211 = scmp.ne.s32.totalorder %s206, %s208
      %p212 = scmp.eq.s32.totalorder %s22, 0
      %p213 = por %p211, %p212
      %p214 = scmp.ne.s32.totalorder %s206, %s208
      %p215 = scmp.eq.s32.totalorder %s27, 1
      %p216 = por %p214, %p215
      %p217 = scmp.ne.s32.totalorder %s208, %s209
      %p218 = scmp.eq.s32.totalorder %s27, 0
      %p219 = por %p217, %p218
      %p220 = scmp.ne.s32.totalorder %s208, %s209
      %p221 = scmp.eq.s32.totalorder %s28, 1
      %p222 = por %p220, %p221
      %p224 = scmp.ne.s32.totalorder %s209, %s223
      %p225 = scmp.eq.s32.totalorder %s28, 0
      %p226 = por %p224, %p225
      %s227 = ssub.s32 %s29, %s41
      %p228 = scmp.eq.s32.totalorder %s227, 0
      %s230 = sadd.s32 %s229, 1
      %s231 = scalar_select %p228, %s229, %s230
      %p234 = pneg %p228
      %p235 = scmp.eq.s32.totalorder %s22, 1
      %p236 = por %p234, %p235
      %p237 = scmp.ne.s32.totalorder %s229, %s232
      %p238 = scmp.eq.s32.totalorder %s22, 0
      %p239 = por %p237, %p238
      %p240 = scmp.ne.s32.totalorder %s229, %s232
      %p241 = scmp.eq.s32.totalorder %s27, 1
      %p242 = por %p240, %p241
      %p243 = scmp.ne.s32.totalorder %s232, %s233
      %p244 = scmp.eq.s32.totalorder %s27, 0
      %p245 = por %p243, %p244
      %p246 = scmp.ne.s32.totalorder %s232, %s233
      %p247 = scmp.eq.s32.totalorder %s28, 1
      %p248 = por %p246, %p247
      %p250 = scmp.ne.s32.totalorder %s233, %s249
      %p251 = scmp.eq.s32.totalorder %s28, 0
      %p252 = por %p250, %p251
      %p253 = scmp.le.s32.totalorder 1, %s22
      %p254 = scmp.lt.s32.totalorder %s22, 3
      %p255 = pnand %p253, %p254
      %p256 = pneg %p255
      // Predicated region
      $region9: #{tpu_custom_call.1} parent=5 // pred_check
        _
      $region10: #{tpu_custom_call.1} parent=5 // pred_check_branch
        %258 = sbr.rel (%p255) target = $region12
      $region11: #{tpu_custom_call.1} parent=5 // pred_region
        %s259 = ssub.s32 %s22, 1
        // Predicated region
        $region13: #{tpu_custom_call.1} parent=11 // pred_check
          %p260 = pneg %p135
        $region14: #{tpu_custom_call.1} parent=11 // pred_check_branch
          %262 = sbr.rel (%p260) target = $region16
        $region15: #{tpu_custom_call.1} parent=11 // pred_region
          %s264 = ssub.s32 2048, 2048
          %265 = vsyncadd [#allocation9], %s264
          %s266 = sshll.u32 [#allocation8], 4
          %s267 = int_to_ptr.vmem [resolvable:$true] %s266
          %272 = dma.hbm_to_vmem [thread:$0]  %s3, 2048, %s267, [#allocation9], 128, 128, 8
        $region16: #{tpu_custom_call.1} parent=11 // pred_fallthru
          _
        // Predicated region
        $region17: #{tpu_custom_call.1} parent=11 // pred_check
          %p273 = pneg %p156
        $region18: #{tpu_custom_call.1} parent=11 // pred_check_branch
          %275 = sbr.rel (%p273) target = $region20
        $region19: #{tpu_custom_call.1} parent=11 // pred_region
          _
        $region20: #{tpu_custom_call.1} parent=11 // pred_fallthru
          _
        // Predicated region
        $region21: #{tpu_custom_call.1} parent=11 // pred_check
          %p276 = pneg %p177
        $region22: #{tpu_custom_call.1} parent=11 // pred_check_branch
          %278 = sbr.rel (%p276) target = $region24
        $region23: #{tpu_custom_call.1} parent=11 // pred_region
          %s280 = ssub.s32 2048, 2048
          %281 = vsyncadd [#allocation9], %s280
          %s282 = sshll.u32 [#allocation10], 4
          %s283 = int_to_ptr.vmem [resolvable:$true] %s282
          %288 = dma.hbm_to_vmem [thread:$0]  %s5, 2048, %s283, [#allocation9], 128, 128, 8
        $region24: #{tpu_custom_call.1} parent=11 // pred_fallthru
          _
        // Predicated region
        $region25: #{tpu_custom_call.1} parent=11 // pred_check
          %p289 = pneg %p198
        $region26: #{tpu_custom_call.1} parent=11 // pred_check_branch
          %291 = sbr.rel (%p289) target = $region28
        $region27: #{tpu_custom_call.1} parent=11 // pred_region
          %s293 = ssub.s32 2048, 2048
          %294 = vsyncadd [#allocation12], %s293
          %s295 = sshll.u32 [#allocation11], 4
          %s296 = int_to_ptr.vmem [resolvable:$true] %s295
          %301 = dma.hbm_to_vmem [thread:$0]  %s6, 2048, %s296, [#allocation12], 128, 128, 8
        $region28: #{tpu_custom_call.1} parent=11 // pred_fallthru
          _
        // Predicated region
        $region29: #{tpu_custom_call.1} parent=11 // pred_check
          %p302 = pneg %p219
        $region30: #{tpu_custom_call.1} parent=11 // pred_check_branch
          %304 = sbr.rel (%p302) target = $region32
        $region31: #{tpu_custom_call.1} parent=11 // pred_region
          _
        $region32: #{tpu_custom_call.1} parent=11 // pred_fallthru
          _
      $region12: #{tpu_custom_call.1} parent=5 // pred_fallthru
        _
      %p305 = scmp.lt.s32.totalorder %s22, 2
      // Predicated region
      $region33: #{tpu_custom_call.1} parent=5 // pred_check
        %p306 = pneg %p305
      $region34: #{tpu_custom_call.1} parent=5 // pred_check_branch
        %308 = sbr.rel (%p306) target = $region36
      $region35: #{tpu_custom_call.1} parent=5 // pred_region
        // Predicated region
        $region37: #{tpu_custom_call.1} parent=35 // pred_check
          %p309 = pneg %p54
        $region38: #{tpu_custom_call.1} parent=35 // pred_check_branch
          %311 = sbr.rel (%p309) target = $region40
        $region39: #{tpu_custom_call.1} parent=35 // pred_region
          %p312 = scmp.lt.s32.totalorder %s29, 1
          %s313 = scalar_select %p312, %s29, 1
          %s314 = smul.addr %s313, 2
          %s315 = smul.addr %s314, 8
          %s316 = scalar_lea.vmem %s0, %s315
        $region40: #{tpu_custom_call.1} parent=35 // pred_fallthru
          _
        // Predicated region
        $region41: #{tpu_custom_call.1} parent=35 // pred_check
          %p317 = pneg %p82
        $region42: #{tpu_custom_call.1} parent=35 // pred_check_branch
          %319 = sbr.rel (%p317) target = $region44
        $region43: #{tpu_custom_call.1} parent=35 // pred_region
          %s320 = sand.u32 %s72, 1
          %s321 = scalar_lea.sflag [#allocation6], %s320
          %s322 = sand.u32 %s72, 1
          %s323 = smul.addr %s322, 128
          %s324 = scalar_lea.vmem [#allocation5], %s323
          %s325 = smul.u32 16, %s30
          %s327 = ssub.s32 2048, 2048
          %328 = vsyncadd %s321, %s327
          %s329 = smul.addr %s29, 16
          %s330 = sadd.s32 %s325, %s329
          %s331 = smul.addr %s330, 128
          %s332 = scalar_lea.hbm %s1, %s331
          %s333 = sshll.u32 %s324, 4
          %s334 = int_to_ptr.vmem [resolvable:$true] %s333
          %339 = dma.hbm_to_vmem [thread:$0]  %s332, 2048, %s334, %s321, 128, 128, 8
        $region44: #{tpu_custom_call.1} parent=35 // pred_fallthru
          _
        // Predicated region
        $region45: #{tpu_custom_call.1} parent=35 // pred_check
          %p340 = pneg %p108
        $region46: #{tpu_custom_call.1} parent=35 // pred_check_branch
          %342 = sbr.rel (%p340) target = $region48
        $region47: #{tpu_custom_call.1} parent=35 // pred_region
          %p343 = scmp.lt.s32.totalorder %s29, 1
          %s344 = scalar_select %p343, %s29, 1
          %s345 = smul.addr %s344, 2
          %s346 = smul.addr %s345, 8
          %s347 = scalar_lea.vmem %s2, %s346
        $region48: #{tpu_custom_call.1} parent=35 // pred_fallthru
          _
      $region36: #{tpu_custom_call.1} parent=5 // pred_fallthru
        _
      %p348 = scmp.le.s32.totalorder 1, %s22
      %p349 = scmp.lt.s32.totalorder %s22, 3
      %p350 = pnand %p348, %p349
      %p351 = pneg %p350
      // Predicated region
      $region49: #{tpu_custom_call.1} parent=5 // pred_check
        _
      $region50: #{tpu_custom_call.1} parent=5 // pred_check_branch
        %353 = sbr.rel (%p350) target = $region52
      $region51: #{tpu_custom_call.1} parent=5 // pred_region
        %s354 = ssub.s32 %s22, 1
        %s355 = sand.u32 %s75, 1
        %s356 = scalar_lea.sflag [#allocation6], %s355
        %s357 = sand.u32 %s75, 1
        %s358 = smul.addr %s357, 128
        %s359 = scalar_lea.vmem [#allocation5], %s358
        // Predicated region
        $region53: #{tpu_custom_call.1} parent=51 // pred_check
          %p360 = pneg %p88
        $region54: #{tpu_custom_call.1} parent=51 // pred_check_branch
          %362 = sbr.rel (%p360) target = $region56
        $region55: #{tpu_custom_call.1} parent=51 // pred_region
          %363 = dma.done %s356, 2048
        $region56: #{tpu_custom_call.1} parent=51 // pred_fallthru
          _
        // Predicated region
        $region57: #{tpu_custom_call.1} parent=51 // pred_check
          %p364 = pneg %p135
        $region58: #{tpu_custom_call.1} parent=51 // pred_check_branch
          %366 = sbr.rel (%p364) target = $region60
        $region59: #{tpu_custom_call.1} parent=51 // pred_region
          %367 = dma.done [#allocation9], 2048
        $region60: #{tpu_custom_call.1} parent=51 // pred_fallthru
          _
        // Predicated region
        $region61: #{tpu_custom_call.1} parent=51 // pred_check
          %p368 = pneg %p177
        $region62: #{tpu_custom_call.1} parent=51 // pred_check_branch
          %370 = sbr.rel (%p368) target = $region64
        $region63: #{tpu_custom_call.1} parent=51 // pred_region
          %371 = dma.done [#allocation9], 2048
        $region64: #{tpu_custom_call.1} parent=51 // pred_fallthru
          _
        // Predicated region
        $region65: #{tpu_custom_call.1} parent=51 // pred_check
          %p372 = pneg %p198
        $region66: #{tpu_custom_call.1} parent=51 // pred_check_branch
          %374 = sbr.rel (%p372) target = $region68
        $region67: #{tpu_custom_call.1} parent=51 // pred_region
          %375 = dma.done [#allocation12], 2048
        $region68: #{tpu_custom_call.1} parent=51 // pred_fallthru
          _
        %p376 = scmp.lt.s32.totalorder %s31, 1
        %s377 = scalar_select %p376, %s31, 1
        %s378 = smul.addr %s377, 2
        %s379 = smul.addr %s378, 8
        %s380 = scalar_lea.vmem %s0, %s379
        %p381 = pneg %p60
        %p382 = pneg %p57
        %s383 = sand.u32 %s75, 1
        %s384 = scalar_lea.sflag [#allocation6], %s383
        %s385 = sand.u32 %s75, 1
        %s386 = smul.addr %s385, 128
        %s387 = scalar_lea.vmem [#allocation5], %s386
        %p388 = pneg %p88
        %p389 = pneg %p85
        %p390 = scmp.lt.s32.totalorder %s31, 1
        %s391 = scalar_select %p390, %s31, 1
        %s392 = smul.addr %s391, 2
        %s393 = smul.addr %s392, 8
        %s394 = scalar_lea.vmem %s2, %s393
        %p395 = pneg %p114
        %p396 = pneg %p111
        %p397 = pneg %p135
        %p398 = pneg %p132
        %p399 = pneg %p156
        %p400 = pneg %p153
        %p401 = pneg %p177
        %p402 = pneg %p174
        %p403 = pneg %p198
        %p404 = pneg %p195
        %p405 = pneg %p219
        %p406 = pneg %p216
        %p407 = pneg %p245
        %p408 = pneg %p242
        %s409 = sand.u32 %s232, 1
        %s410 = scalar_lea.sflag [#allocation7], %s409
        %s411 = sand.u32 %s232, 1
        %s412 = smul.addr %s411, 16
        %s413 = scalar_lea.vmem [#allocation13], %s412
        %p414 = scmp.lt.s32.totalorder %s31, 1
        %s415 = scalar_select %p414, %s31, 1
        %s416 = smul.addr %s415, 2
        %s417 = smul.addr %s416, 8
        %s418 = scalar_lea.vmem %s0, %s417
        %s419 = smul.u32 16, %s32
        %p420 = scmp.lt.s32.totalorder %s31, 1
        %s421 = scalar_select %p420, %s31, 1
        %s422 = smul.addr %s421, 2
        %s423 = smul.addr %s422, 8
        %s424 = scalar_lea.vmem %s2, %s423
        %p426 = scmp.eq.s32.totalorder %s32, 0
        // Predicated region
        $region69: #{tpu_custom_call.1} parent=51 // pred_check
          %p427 = pneg %p426
        $region70: #{tpu_custom_call.1} parent=51 // pred_check_branch
          %429 = sbr.rel (%p427) target = $region72
        $region71: #{tpu_custom_call.1} parent=51 // pred_region
          %vm430 = vcmask 7168
          %431 = vst.msk [vmem:[#allocation2] sm:$0xff] %vm430, -inf
          %432 = vst.msk [vmem:[#allocation2 + $0x8] sm:$0xff] %vm430, -inf
          %433 = vst.msk [vmem:[#allocation3] sm:$0xff] %vm430, 0.0
          %434 = vst.msk [vmem:[#allocation3 + $0x8] sm:$0xff] %vm430, 0.0
          %435 = vst [vmem:[#allocation4] sm:$0xff] 0.0
          %436 = vst [vmem:[#allocation4 + $0x8] sm:$0xff] 0.0
        $region72: #{tpu_custom_call.1} parent=51 // pred_fallthru
          _
        %v437 = vld [vmem:[%s418] sm:$0xff]
        %v438 = vld [vmem:[%s418 + $0x8] sm:$0xff]
        %v439 = vpack.c.bf16 %v438, %v437
        %v440 = vld [vmem:[%s359] sm:$0xff]
        %v441 = vld [vmem:[%s359 + $0x8] sm:$0xff]
        %v442 = vld [vmem:[%s359 + $0x10] sm:$0xff]
        %v443 = vld [vmem:[%s359 + $0x18] sm:$0xff]
        %v444 = vld [vmem:[%s359 + $0x20] sm:$0xff]
        %v445 = vld [vmem:[%s359 + $0x28] sm:$0xff]
        %v446 = vld [vmem:[%s359 + $0x30] sm:$0xff]
        %v447 = vld [vmem:[%s359 + $0x38] sm:$0xff]
        %v448 = vld [vmem:[%s359 + $0x40] sm:$0xff]
        %v449 = vld [vmem:[%s359 + $0x48] sm:$0xff]
        %v450 = vld [vmem:[%s359 + $0x50] sm:$0xff]
        %v451 = vld [vmem:[%s359 + $0x58] sm:$0xff]
        %v452 = vld [vmem:[%s359 + $0x60] sm:$0xff]
        %v453 = vld [vmem:[%s359 + $0x68] sm:$0xff]
        %v454 = vld [vmem:[%s359 + $0x70] sm:$0xff]
        %v455 = vld [vmem:[%s359 + $0x78] sm:$0xff]
        %v456 = vpack.c.bf16 %v441, %v440
        %v457 = vpack.c.bf16 %v443, %v442
        %v458 = vpack.c.bf16 %v445, %v444
        %v459 = vpack.c.bf16 %v447, %v446
        %v460 = vpack.c.bf16 %v449, %v448
        %v461 = vpack.c.bf16 %v451, %v450
        %v462 = vpack.c.bf16 %v453, %v452
        %v463 = vpack.c.bf16 %v455, %v454
        %464 = vmatprep.subr.bf16.mxu0 0
        %465 = vmatpush1.bf16.xpose.msra.mxu0 %v456
        %466 = vmatprep.subr.bf16.mxu0 0
        %467 = vmatpush1.bf16.xpose.msra.mxu0 %v457
        %468 = vmatprep.subr.bf16.mxu0 0
        %469 = vmatpush1.bf16.xpose.msra.mxu0 %v458
        %470 = vmatprep.subr.bf16.mxu0 0
        %471 = vmatpush1.bf16.xpose.msra.mxu0 %v459
        %472 = vmatprep.subr.bf16.mxu0 0
        %473 = vmatpush1.bf16.xpose.msra.mxu0 %v460
        %474 = vmatprep.subr.bf16.mxu0 0
        %475 = vmatpush1.bf16.xpose.msra.mxu0 %v461
        %476 = vmatprep.subr.bf16.mxu0 0
        %477 = vmatpush1.bf16.xpose.msra.mxu0 %v462
        %478 = vmatprep.subr.bf16.mxu0 0
        %479 = vmatpush1.bf16.xpose.msra.mxu0 %v463
        %480 = vmatprep.subr.bf16.mxu0 0
        %481 = vmatpush1.bf16.xpose.msra.mxu0 0
        %482 = vmatprep.subr.bf16.mxu0 0
        %483 = vmatpush1.bf16.xpose.msra.mxu0 0
        %484 = vmatprep.subr.bf16.mxu0 0
        %485 = vmatpush1.bf16.xpose.msra.mxu0 0
        %486 = vmatprep.subr.bf16.mxu0 0
        %487 = vmatpush1.bf16.xpose.msra.mxu0 0
        %488 = vmatprep.subr.bf16.mxu0 0
        %489 = vmatpush1.bf16.xpose.msra.mxu0 0
        %490 = vmatprep.subr.bf16.mxu0 0
        %491 = vmatpush1.bf16.xpose.msra.mxu0 0
        %492 = vmatprep.subr.bf16.mxu0 0
        %493 = vmatpush1.bf16.xpose.msra.mxu0 0
        %494 = vmatprep.subr.bf16.mxu0 0
        %495 = vmatpush1.bf16.xpose.msra.mxu0 0
        %496 = vmatprep.mubr.bf16.mxu0 0
        %497 = vmatmul.mubr.bf16.gmra.mrb[0].mxu0 %v439
        %v498 = vpop.f32.mrb[0].mxu0
        %v499 = vadd.f32 0.0, %v498
        %v500 = vpop.f32.mrb[0].mxu0
        %v501 = vpop.f32.mrb[0].mxu0
        %v502 = vadd.f32 0.0, %v501
        %v503 = vpop.f32.mrb[0].mxu0
        %504 = vdwg.mxu0
        %s505 = smul.u32 %s32, 128
        %v506 = vlaneseq
        %v507 = vand.u32 %v506, 127
        %v508 = vstv %s505
        %v509 = vadd.s32 %v508, %v507
        %vm510 = vcmp.lt.s32.totalorder %v509, 8
        %v511 = vsel %vm510, 1, 0
        %vm512 = vcmp.eq.s32.totalorder %v511, 1
        %v513 = vsel %vm512, %v499, -1e+30
        %v514 = vsel %vm512, %v502, -1e+30
        %v515 = vld [vmem:[#allocation2] sm:$0xff]
        %v516 = vld [vmem:[#allocation2 + $0x8] sm:$0xff]
        %517 = vmax.xlane.f32.xlu0 %v513
        %v518 = vpop.xlane.xlu0 %517
        %519 = vmax.xlane.f32.xlu0 %v514
        %v520 = vpop.xlane.xlu0 %519
        %v521 = vmax.f32 %v515, %v518
        %v522 = vmax.f32 %v516, %v520
        %v523 = vsub.f32 %v515, %v521
        %v524 = vsub.f32 %v516, %v522
        %v525 = vmul.f32 %v523, 1.442695
        %v526 = vpow.pop %v525
        %v527 = vmul.f32 %v524, 1.442695
        %v528 = vpow.pop %v527
        %530 = vset.pattern.permute.xlu0 0
        %531 = vperm.xlu0 %530, %v521
        %v532 = vpop.permute.xlu0 %531
        %535 = vset.pattern.permute.xlu0 0
        %536 = vperm.xlu0 %535, %v522
        %v537 = vpop.permute.xlu0 %536
        %v539 = vsub.f32 %v513, %v532
        %v540 = vsub.f32 %v514, %v537
        %v541 = vmul.f32 %v539, 1.442695
        %v542 = vpow.pop %v541
        %v543 = vmul.f32 %v540, 1.442695
        %v544 = vpow.pop %v543
        %v545 = vld [vmem:[#allocation3] sm:$0xff]
        %v546 = vld [vmem:[#allocation3 + $0x8] sm:$0xff]
        %v547 = vmul.f32 %v526, %v545
        %v548 = vmul.f32 %v528, %v546
        %549 = vadd.xlane.f32.xlu0 %v542
        %v550 = vpop.xlane.xlu0 %549
        %551 = vadd.xlane.f32.xlu0 %v544
        %v552 = vpop.xlane.xlu0 %551
        %v553 = vadd.f32 %v547, %v550
        %v554 = vadd.f32 %v548, %v552
        %vm555 = vcmask 7168
        %556 = vst.msk [vmem:[#allocation3] sm:$0xff] %vm555, %v553
        %557 = vst.msk [vmem:[#allocation3 + $0x8] sm:$0xff] %vm555, %v554
        %v558 = vpack.c.bf16 %v544, %v542
        %559 = vmatprep.subr.bf16.mxu0 0
        %560 = vmatpush1.bf16.msra.mxu0 %v456
        %561 = vmatprep.subr.bf16.mxu0 0
        %562 = vmatpush1.bf16.msra.mxu0 %v457
        %563 = vmatprep.subr.bf16.mxu0 0
        %564 = vmatpush1.bf16.msra.mxu0 %v458
        %565 = vmatprep.subr.bf16.mxu0 0
        %566 = vmatpush1.bf16.msra.mxu0 %v459
        %567 = vmatprep.subr.bf16.mxu0 0
        %568 = vmatpush1.bf16.msra.mxu0 %v460
        %569 = vmatprep.subr.bf16.mxu0 0
        %570 = vmatpush1.bf16.msra.mxu0 %v461
        %571 = vmatprep.subr.bf16.mxu0 0
        %572 = vmatpush1.bf16.msra.mxu0 %v462
        %573 = vmatprep.subr.bf16.mxu0 0
        %574 = vmatpush1.bf16.msra.mxu0 %v463
        %575 = vmatprep.subr.bf16.mxu0 0
        %576 = vmatpush1.bf16.msra.mxu0 0
        %577 = vmatprep.subr.bf16.mxu0 0
        %578 = vmatpush1.bf16.msra.mxu0 0
        %579 = vmatprep.subr.bf16.mxu0 0
        %580 = vmatpush1.bf16.msra.mxu0 0
        %581 = vmatprep.subr.bf16.mxu0 0
        %582 = vmatpush1.bf16.msra.mxu0 0
        %583 = vmatprep.subr.bf16.mxu0 0
        %584 = vmatpush1.bf16.msra.mxu0 0
        %585 = vmatprep.subr.bf16.mxu0 0
        %586 = vmatpush1.bf16.msra.mxu0 0
        %587 = vmatprep.subr.bf16.mxu0 0
        %588 = vmatpush1.bf16.msra.mxu0 0
        %589 = vmatprep.subr.bf16.mxu0 0
        %590 = vmatpush1.bf16.msra.mxu0 0
        %591 = vmatprep.mubr.bf16.mxu0 0
        %592 = vmatmul.mubr.bf16.gmra.mrb[0].mxu0 %v558
        %v593 = vpop.f32.mrb[0].mxu0
        %v594 = vadd.f32 0.0, %v593
        %v595 = vpop.f32.mrb[0].mxu0
        %v596 = vpop.f32.mrb[0].mxu0
        %v597 = vadd.f32 0.0, %v596
        %v598 = vpop.f32.mrb[0].mxu0
        %599 = vdwg.mxu0
        %v600 = vld [vmem:[#allocation4] sm:$0xff]
        %v601 = vld [vmem:[#allocation4 + $0x8] sm:$0xff]
        %603 = vset.pattern.permute.xlu0 0
        %604 = vperm.xlu0 %603, %v526
        %v605 = vpop.permute.xlu0 %604
        %608 = vset.pattern.permute.xlu0 0
        %609 = vperm.xlu0 %608, %v528
        %v610 = vpop.permute.xlu0 %609
        %v612 = vmul.f32 %v605, %v600
        %v613 = vmul.f32 %v610, %v601
        %v614 = vadd.f32 %v612, %v594
        %v615 = vadd.f32 %v613, %v597
        %616 = vst [vmem:[#allocation4] sm:$0xff] %v614
        %617 = vst [vmem:[#allocation4 + $0x8] sm:$0xff] %v615
        %618 = vst.msk [vmem:[#allocation2] sm:$0xff] %vm555, %v521
        %619 = vst.msk [vmem:[#allocation2 + $0x8] sm:$0xff] %vm555, %v522
        // Predicated region
        $region73: #{tpu_custom_call.1} parent=51 // pred_check
          %p620 = pneg %p426
        $region74: #{tpu_custom_call.1} parent=51 // pred_check_branch
          %622 = sbr.rel (%p620) target = $region76
        $region75: #{tpu_custom_call.1} parent=51 // pred_region
          %v623 = vld [vmem:[#allocation3] sm:$0xff]
          %v624 = vld [vmem:[#allocation3 + $0x8] sm:$0xff]
          %v625 = vrcp.pop %v623
          %v626 = vrcp.pop %v624
          %v627 = vld [vmem:[#allocation4] sm:$0xff]
          %v628 = vld [vmem:[#allocation4 + $0x8] sm:$0xff]
          %630 = vset.pattern.permute.xlu0 0
          %631 = vperm.xlu0 %630, %v625
          %v632 = vpop.permute.xlu0 %631
          %635 = vset.pattern.permute.xlu0 0
          %636 = vperm.xlu0 %635, %v626
          %v637 = vpop.permute.xlu0 %636
          %v639 = vmul.f32 %v627, %v632
          %v640 = vmul.f32 %v628, %v637
          %v641 = vpack.c.bf16 %v640, %v639
          %v642 = vld [vmem:[#allocation8] sm:$0xff]
          %v643 = vld [vmem:[#allocation8 + $0x8] sm:$0xff]
          %v644 = vld [vmem:[#allocation8 + $0x10] sm:$0xff]
          %v645 = vld [vmem:[#allocation8 + $0x18] sm:$0xff]
          %v646 = vld [vmem:[#allocation8 + $0x20] sm:$0xff]
          %v647 = vld [vmem:[#allocation8 + $0x28] sm:$0xff]
          %v648 = vld [vmem:[#allocation8 + $0x30] sm:$0xff]
          %v649 = vld [vmem:[#allocation8 + $0x38] sm:$0xff]
          %v650 = vld [vmem:[#allocation8 + $0x40] sm:$0xff]
          %v651 = vld [vmem:[#allocation8 + $0x48] sm:$0xff]
          %v652 = vld [vmem:[#allocation8 + $0x50] sm:$0xff]
          %v653 = vld [vmem:[#allocation8 + $0x58] sm:$0xff]
          %v654 = vld [vmem:[#allocation8 + $0x60] sm:$0xff]
          %v655 = vld [vmem:[#allocation8 + $0x68] sm:$0xff]
          %v656 = vld [vmem:[#allocation8 + $0x70] sm:$0xff]
          %v657 = vld [vmem:[#allocation8 + $0x78] sm:$0xff]
          %v658 = vpack.c.bf16 %v643, %v642
          %v659 = vpack.c.bf16 %v645, %v644
          %v660 = vpack.c.bf16 %v647, %v646
          %v661 = vpack.c.bf16 %v649, %v648
          %v662 = vpack.c.bf16 %v651, %v650
          %v663 = vpack.c.bf16 %v653, %v652
          %v664 = vpack.c.bf16 %v655, %v654
          %v665 = vpack.c.bf16 %v657, %v656
          %v666 = vld [vmem:[%s4] sm:$0x1]
          %v668 = vlaneseq
          %v669 = vshrl.u32 %v668, 7
          %v670 = vsub.s32 0, %v669
          %v671 = vrot.slane %v666, %v670
          %673 = vmatprep.subr.bf16.mxu0 0
          %674 = vmatpush1.bf16.msra.mxu0 %v658
          %675 = vmatprep.subr.bf16.mxu0 0
          %676 = vmatpush1.bf16.msra.mxu0 %v659
          %677 = vmatprep.subr.bf16.mxu0 0
          %678 = vmatpush1.bf16.msra.mxu0 %v660
          %679 = vmatprep.subr.bf16.mxu0 0
          %680 = vmatpush1.bf16.msra.mxu0 %v661
          %681 = vmatprep.subr.bf16.mxu0 0
          %682 = vmatpush1.bf16.msra.mxu0 %v662
          %683 = vmatprep.subr.bf16.mxu0 0
          %684 = vmatpush1.bf16.msra.mxu0 %v663
          %685 = vmatprep.subr.bf16.mxu0 0
          %686 = vmatpush1.bf16.msra.mxu0 %v664
          %687 = vmatprep.subr.bf16.mxu0 0
          %688 = vmatpush1.bf16.msra.mxu0 %v665
          %689 = vmatprep.subr.bf16.mxu0 0
          %690 = vmatpush1.bf16.msra.mxu0 0
          %691 = vmatprep.subr.bf16.mxu0 0
          %692 = vmatpush1.bf16.msra.mxu0 0
          %693 = vmatprep.subr.bf16.mxu0 0
          %694 = vmatpush1.bf16.msra.mxu0 0
          %695 = vmatprep.subr.bf16.mxu0 0
          %696 = vmatpush1.bf16.msra.mxu0 0
          %697 = vmatprep.subr.bf16.mxu0 0
          %698 = vmatpush1.bf16.msra.mxu0 0
          %699 = vmatprep.subr.bf16.mxu0 0
          %700 = vmatpush1.bf16.msra.mxu0 0
          %701 = vmatprep.subr.bf16.mxu0 0
          %702 = vmatpush1.bf16.msra.mxu0 0
          %703 = vmatprep.subr.bf16.mxu0 0
          %704 = vmatpush1.bf16.msra.mxu0 0
          %705 = vmatprep.mubr.bf16.mxu0 0
          %706 = vmatmul.mubr.bf16.gmra.mrb[0].mxu0 %v439
          %v707 = vpop.f32.mrb[0].mxu0
          %v708 = vadd.f32 %v671, %v707
          %v709 = vpop.f32.mrb[0].mxu0
          %v710 = vpop.f32.mrb[0].mxu0
          %v711 = vadd.f32 %v671, %v710
          %v712 = vpop.f32.mrb[0].mxu0
          %713 = vdwg.mxu0
          %v714 = vxor.u32 %v708, 2147483648
          %v715 = vxor.u32 %v711, 2147483648
          %v716 = vmul.f32 %v714, 1.442695
          %v717 = vpow.pop %v716
          %v718 = vmul.f32 %v715, 1.442695
          %v719 = vpow.pop %v718
          %v720 = vadd.f32 %v717, 1.0
          %v721 = vadd.f32 %v719, 1.0
          %v722 = vrcp.pop %v720
          %v723 = vmul.f32 1.0, %v722
          %v724 = vrcp.pop %v721
          %v725 = vmul.f32 1.0, %v724
          %v726 = vld [vmem:[#allocation10] sm:$0xff]
          %v727 = vld [vmem:[#allocation10 + $0x8] sm:$0xff]
          %v728 = vld [vmem:[#allocation10 + $0x10] sm:$0xff]
          %v729 = vld [vmem:[#allocation10 + $0x18] sm:$0xff]
          %v730 = vld [vmem:[#allocation10 + $0x20] sm:$0xff]
          %v731 = vld [vmem:[#allocation10 + $0x28] sm:$0xff]
          %v732 = vld [vmem:[#allocation10 + $0x30] sm:$0xff]
          %v733 = vld [vmem:[#allocation10 + $0x38] sm:$0xff]
          %v734 = vld [vmem:[#allocation10 + $0x40] sm:$0xff]
          %v735 = vld [vmem:[#allocation10 + $0x48] sm:$0xff]
          %v736 = vld [vmem:[#allocation10 + $0x50] sm:$0xff]
          %v737 = vld [vmem:[#allocation10 + $0x58] sm:$0xff]
          %v738 = vld [vmem:[#allocation10 + $0x60] sm:$0xff]
          %v739 = vld [vmem:[#allocation10 + $0x68] sm:$0xff]
          %v740 = vld [vmem:[#allocation10 + $0x70] sm:$0xff]
          %v741 = vld [vmem:[#allocation10 + $0x78] sm:$0xff]
          %v742 = vpack.c.bf16 %v727, %v726
          %v743 = vpack.c.bf16 %v729, %v728
          %v744 = vpack.c.bf16 %v731, %v730
          %v745 = vpack.c.bf16 %v733, %v732
          %v746 = vpack.c.bf16 %v735, %v734
          %v747 = vpack.c.bf16 %v737, %v736
          %v748 = vpack.c.bf16 %v739, %v738
          %v749 = vpack.c.bf16 %v741, %v740
          %v750 = vld [vmem:[#allocation11] sm:$0xff]
          %v751 = vld [vmem:[#allocation11 + $0x8] sm:$0xff]
          %v752 = vld [vmem:[#allocation11 + $0x10] sm:$0xff]
          %v753 = vld [vmem:[#allocation11 + $0x18] sm:$0xff]
          %v754 = vld [vmem:[#allocation11 + $0x20] sm:$0xff]
          %v755 = vld [vmem:[#allocation11 + $0x28] sm:$0xff]
          %v756 = vld [vmem:[#allocation11 + $0x30] sm:$0xff]
          %v757 = vld [vmem:[#allocation11 + $0x38] sm:$0xff]
          %v758 = vld [vmem:[#allocation11 + $0x40] sm:$0xff]
          %v759 = vld [vmem:[#allocation11 + $0x48] sm:$0xff]
          %v760 = vld [vmem:[#allocation11 + $0x50] sm:$0xff]
          %v761 = vld [vmem:[#allocation11 + $0x58] sm:$0xff]
          %v762 = vld [vmem:[#allocation11 + $0x60] sm:$0xff]
          %v763 = vld [vmem:[#allocation11 + $0x68] sm:$0xff]
          %v764 = vld [vmem:[#allocation11 + $0x70] sm:$0xff]
          %v765 = vld [vmem:[#allocation11 + $0x78] sm:$0xff]
          %v766 = vpack.c.bf16 %v751, %v750
          %v767 = vpack.c.bf16 %v753, %v752
          %v768 = vpack.c.bf16 %v755, %v754
          %v769 = vpack.c.bf16 %v757, %v756
          %v770 = vpack.c.bf16 %v759, %v758
          %v771 = vpack.c.bf16 %v761, %v760
          %v772 = vpack.c.bf16 %v763, %v762
          %v773 = vpack.c.bf16 %v765, %v764
          %774 = vmatprep.subr.bf16.mxu0 0
          %775 = vmatpush1.bf16.msra.mxu0 %v766
          %776 = vmatprep.subr.bf16.mxu0 0
          %777 = vmatpush1.bf16.msra.mxu0 %v767
          %778 = vmatprep.subr.bf16.mxu0 0
          %779 = vmatpush1.bf16.msra.mxu0 %v768
          %780 = vmatprep.subr.bf16.mxu0 0
          %781 = vmatpush1.bf16.msra.mxu0 %v769
          %782 = vmatprep.subr.bf16.mxu0 0
          %783 = vmatpush1.bf16.msra.mxu0 %v770
          %784 = vmatprep.subr.bf16.mxu0 0
          %785 = vmatpush1.bf16.msra.mxu0 %v771
          %786 = vmatprep.subr.bf16.mxu0 0
          %787 = vmatpush1.bf16.msra.mxu0 %v772
          %788 = vmatprep.subr.bf16.mxu0 0
          %789 = vmatpush1.bf16.msra.mxu0 %v773
          %790 = vmatprep.subr.bf16.mxu0 0
          %791 = vmatpush1.bf16.msra.mxu0 0
          %792 = vmatprep.subr.bf16.mxu0 0
          %793 = vmatpush1.bf16.msra.mxu0 0
          %794 = vmatprep.subr.bf16.mxu0 0
          %795 = vmatpush1.bf16.msra.mxu0 0
          %796 = vmatprep.subr.bf16.mxu0 0
          %797 = vmatpush1.bf16.msra.mxu0 0
          %798 = vmatprep.subr.bf16.mxu0 0
          %799 = vmatpush1.bf16.msra.mxu0 0
          %800 = vmatprep.subr.bf16.mxu0 0
          %801 = vmatpush1.bf16.msra.mxu0 0
          %802 = vmatprep.subr.bf16.mxu0 0
          %803 = vmatpush1.bf16.msra.mxu0 0
          %804 = vmatprep.subr.bf16.mxu0 0
          %805 = vmatpush1.bf16.msra.mxu0 0
          %806 = vmatprep.mubr.bf16.mxu0 0
          %807 = vmatmul.mubr.bf16.gmra.mrb[0].mxu0 %v439
          %v808 = vpop.f32.mrb[0].mxu0
          %v809 = vadd.f32 0.0, %v808
          %v810 = vpop.f32.mrb[0].mxu0
          %v811 = vpop.f32.mrb[0].mxu0
          %v812 = vadd.f32 0.0, %v811
          %v813 = vpop.f32.mrb[0].mxu0
          %814 = vdwg.mxu0
          %815 = vmatprep.subr.bf16.mxu0 0
          %816 = vmatpush1.bf16.msra.mxu0 %v742
          %817 = vmatprep.subr.bf16.mxu0 0
          %818 = vmatpush1.bf16.msra.mxu0 %v743
          %819 = vmatprep.subr.bf16.mxu0 0
          %820 = vmatpush1.bf16.msra.mxu0 %v744
          %821 = vmatprep.subr.bf16.mxu0 0
          %822 = vmatpush1.bf16.msra.mxu0 %v745
          %823 = vmatprep.subr.bf16.mxu0 0
          %824 = vmatpush1.bf16.msra.mxu0 %v746
          %825 = vmatprep.subr.bf16.mxu0 0
          %826 = vmatpush1.bf16.msra.mxu0 %v747
          %827 = vmatprep.subr.bf16.mxu0 0
          %828 = vmatpush1.bf16.msra.mxu0 %v748
          %829 = vmatprep.subr.bf16.mxu0 0
          %830 = vmatpush1.bf16.msra.mxu0 %v749
          %831 = vmatprep.subr.bf16.mxu0 0
          %832 = vmatpush1.bf16.msra.mxu0 0
          %833 = vmatprep.subr.bf16.mxu0 0
          %834 = vmatpush1.bf16.msra.mxu0 0
          %835 = vmatprep.subr.bf16.mxu0 0
          %836 = vmatpush1.bf16.msra.mxu0 0
          %837 = vmatprep.subr.bf16.mxu0 0
          %838 = vmatpush1.bf16.msra.mxu0 0
          %839 = vmatprep.subr.bf16.mxu0 0
          %840 = vmatpush1.bf16.msra.mxu0 0
          %841 = vmatprep.subr.bf16.mxu0 0
          %842 = vmatpush1.bf16.msra.mxu0 0
          %843 = vmatprep.subr.bf16.mxu0 0
          %844 = vmatpush1.bf16.msra.mxu0 0
          %845 = vmatprep.subr.bf16.mxu0 0
          %846 = vmatpush1.bf16.msra.mxu0 0
          %847 = vmatprep.mubr.bf16.mxu0 0
          %848 = vmatmul.mubr.bf16.gmra.mrb[0].mxu0 %v641
          %v849 = vpop.f32.mrb[0].mxu0
          %v850 = vadd.f32 %v809, %v849
          %v851 = vpop.f32.mrb[0].mxu0
          %v852 = vpop.f32.mrb[0].mxu0
          %v853 = vadd.f32 %v812, %v852
          %v854 = vpop.f32.mrb[0].mxu0
          %855 = vdwg.mxu0
          %v856 = vld [vmem:[%s7] sm:$0x1]
          %v858 = vlaneseq
          %v859 = vshrl.u32 %v858, 7
          %v860 = vsub.s32 0, %v859
          %v861 = vrot.slane %v856, %v860
          %v863 = vadd.f32 %v850, %v861
          %v864 = vadd.f32 %v853, %v861
          %v865 = vtanh.pop %v863
          %v866 = vtanh.pop %v864
          %v867 = vld [vmem:[%s424] sm:$0xff]
          %v868 = vld [vmem:[%s424 + $0x8] sm:$0xff]
          %870 = vset.pattern.permute.xlu0 0
          %871 = vperm.xlu0 %870, %v867
          %v872 = vpop.permute.xlu0 %871
          %875 = vset.pattern.permute.xlu0 0
          %876 = vperm.xlu0 %875, %v868
          %v877 = vpop.permute.xlu0 %876
          %v879 = vmul.f32 %v865, %v872
          %v880 = vmul.f32 %v866, %v877
          %v881 = vsub.f32 %v879, %v437
          %v882 = vsub.f32 %v880, %v438
          %v883 = vmul.f32 %v723, %v881
          %v884 = vmul.f32 %v725, %v882
          %v885 = vadd.f32 %v437, %v883
          %v886 = vadd.f32 %v438, %v884
          %887 = vst [vmem:[%s413] sm:$0xff] %v885
          %888 = vst [vmem:[%s413 + $0x8] sm:$0xff] %v886
        $region76: #{tpu_custom_call.1} parent=51 // pred_fallthru
          _
        %s889 = sand.u32 %s232, 1
        %s890 = scalar_lea.sflag [#allocation7], %s889
        %s891 = sand.u32 %s232, 1
        %s892 = smul.addr %s891, 16
        %s893 = scalar_lea.vmem [#allocation13], %s892
        // Predicated region
        $region77: #{tpu_custom_call.1} parent=51 // pred_check
          %p894 = pneg %p242
        $region78: #{tpu_custom_call.1} parent=51 // pred_check_branch
          %896 = sbr.rel (%p894) target = $region80
        $region79: #{tpu_custom_call.1} parent=51 // pred_region
          %s898 = ssub.s32 256, 256
          %899 = vsyncadd %s890, %s898
          %s900 = smul.addr %s31, 2
          %s901 = smul.addr %s900, 128
          %s902 = scalar_lea.hbm %s8, %s901
          %s903 = sshll.u32 %s893, 4
          %s904 = int_to_ptr.vmem [resolvable:$true] %s903
          %909 = dma.vmem_to_hbm [thread:$0]  %s904, 256, %s902, %s890, 128, 128, 8
        $region80: #{tpu_custom_call.1} parent=51 // pred_fallthru
          _
      $region52: #{tpu_custom_call.1} parent=5 // pred_fallthru
        _
      %p910 = scmp.le.s32.totalorder 2, %s22
      // Predicated region
      $region81: #{tpu_custom_call.1} parent=5 // pred_check
        %p911 = pneg %p910
      $region82: #{tpu_custom_call.1} parent=5 // pred_check_branch
        %913 = sbr.rel (%p911) target = $region84
      $region83: #{tpu_custom_call.1} parent=5 // pred_region
        %s914 = ssub.s32 %s22, 2
        // Predicated region
        $region85: #{tpu_custom_call.1} parent=83 // pred_check
          %p915 = pneg %p248
        $region86: #{tpu_custom_call.1} parent=83 // pred_check_branch
          %917 = sbr.rel (%p915) target = $region88
        $region87: #{tpu_custom_call.1} parent=83 // pred_region
          %s918 = sand.u32 %s233, 1
          %s919 = scalar_lea.sflag [#allocation7], %s918
          %s920 = sand.u32 %s233, 1
          %s921 = smul.addr %s920, 16
          %s922 = scalar_lea.vmem [#allocation13], %s921
          %923 = dma.done %s919, 256
        $region88: #{tpu_custom_call.1} parent=83 // pred_fallthru
          _
      $region84: #{tpu_custom_call.1} parent=5 // pred_fallthru
        _
    $region6: #{tpu_custom_call.1} parent=1 // loop_footer
      %s26 = sadd.s32 1, %s22
    $region7: #{tpu_custom_call.1} parent=1 // loop_footer_branch
      %21 = sbr.rel target = $region3
    $region8: #{tpu_custom_call.1} parent=1 // loop_exit
      _
    %924 = vsyncpa [#allocation6], 1
    %s925 = scalar_lea.sflag [#allocation6], 1
    %926 = vsyncpa %s925, 1
    %927 = vsyncpa [#allocation9], 1
    %928 = vsyncpa [#allocation12], 1
    %929 = vsyncpa [#allocation7], 1
    %s930 = scalar_lea.sflag [#allocation7], 1
    %931 = vsyncpa %s930, 1

// kernel: tpu_custom_call.1
$region0: #{tpu_custom_call.1}
  #allocation0 [shape = 'u32[]', space=smem, size = 0x4, offset = 0x4, fixed_abs, tag = 'smem constant byte address 0x4 - core index']
  #allocation1 [shape = 'u32[144,128]{1,0:T(1,128)}', space=vmem, size = 0x12000, scoped, tag = 'internal scratch']
  #allocation2 [shape = 'f32[1,16,1]{2,1,0:T(8,128)}', space=vmem, size = 0x2000, scoped, tag = 'scratch operand']
  #allocation3 [shape = 'f32[1,16,1]{2,1,0:T(8,128)}', space=vmem, size = 0x2000, scoped, tag = 'scratch operand']
  #allocation4 [shape = 'f32[1,16,128]{2,1,0:T(8,128)}', space=vmem, size = 0x2000, scoped, tag = 'scratch operand']
  %s0 = inlined_call_operand.vmem [shape: f32[2,16,128], index: 0, kind: input, shape index: {}]
  %s1 = inlined_call_operand.hbm [shape: f32[2,128,128], index: 1, kind: input, shape index: {}]
  %s2 = inlined_call_operand.vmem [shape: f32[2,16,1], index: 2, kind: input, shape index: {}]
  %s3 = inlined_call_operand.hbm [shape: f32[128,128], index: 3, kind: input, shape index: {}]
  %s4 = inlined_call_operand.vmem [shape: f32[1,128], index: 4, kind: input, shape index: {}]
  %s5 = inlined_call_operand.hbm [shape: f32[128,128], index: 5, kind: input, shape index: {}]
  %s6 = inlined_call_operand.hbm [shape: f32[128,128], index: 6, kind: input, shape index: {}]
  %s7 = inlined_call_operand.vmem [shape: f32[1,128], index: 7, kind: input, shape index: {}]
  %s8 = inlined_call_operand.hbm [shape: f32[2,16,128], index: 8, kind: output, shape index: {}]
  %s9 = sld [smem:[#allocation0]]
  $region89: #{tpu_custom_call.1} parent=0
    _
  %s11 = ssub.s32 1, %s9
  %s12 = scalar_select 0, %s11, %s9
  $region1: #{tpu_custom_call.1} parent=0
    #allocation5 [shape = 'u8[131072]{0}', space=vmem, size = 0x20000, scoped, tag = 'input window, operand 1']
    #allocation6 [shape = 's32[2]{0}', space=sflag, size = 0x8, scoped, tag = 'scoped memory for tpu_custom_call.1']
    #allocation7 [shape = 's32[2]{0}', space=sflag, size = 0x8, scoped, tag = 'scoped memory for tpu_custom_call.1']
    #allocation8 [shape = 'u8[65536]{0}', space=vmem, size = 0x10000, scoped, tag = 'input window, operand 3, single buffered']
    #allocation9 [shape = 's32[1]{0}', space=sflag, size = 0x4, scoped, tag = 'scoped memory for tpu_custom_call.1']
    #allocation10 [shape = 'u8[65536]{0}', space=vmem, size = 0x10000, scoped, tag = 'input window, operand 5, single buffered']
    #allocation11 [shape = 'u8[65536]{0}', space=vmem, size = 0x10000, scoped, tag = 'input window, operand 6, single buffered']
    #allocation12 [shape = 's32[1]{0}', space=sflag, size = 0x4, scoped, tag = 'scoped memory for tpu_custom_call.1']
    #allocation13 [shape = 'u8[16384]{0}', space=vmem, size = 0x4000, scoped, tag = 'output window, operand 0']
    %13 = vsyncpa [#allocation6], 0
    %s14 = scalar_lea.sflag [#allocation6], 1
    %15 = vsyncpa %s14, 0
    %16 = vsyncpa [#allocation9], 0
    %17 = vsyncpa [#allocation12], 0
    %18 = vsyncpa [#allocation7], 0
    %s19 = scalar_lea.sflag [#allocation7], 1
    %20 = vsyncpa %s19, 0
    loop: start=0, step=1, limit=4
    $region2: #{tpu_custom_call.1} parent=1 // loop_pre_header
      _
    $region3: #{tpu_custom_call.1} parent=1 // loop_header
      %s22 = sphi 0, %s26
      %p23 = scmp.ge.s32.totalorder %s22, 4
      %s29 = sphi 0, %s41
      %s30 = sphi 0, %s37
      %s31 = sphi 0, %s29
      %s32 = sphi 0, %s30
      %s33 = sphi 0, %s31
      %s34 = sphi 0, %s32
      %s44 = sphi 0, %s46
      %s47 = sphi 0, %s44
      %s48 = sphi 0, %s47
      %s64 = sphi 0, %s48
      %s72 = sphi 0, %s74
      %s75 = sphi 0, %s72
      %s76 = sphi 0, %s75
      %s92 = sphi 0, %s76
      %s98 = sphi 0, %s100
      %s101 = sphi 0, %s98
      %s102 = sphi 0, %s101
      %s118 = sphi 0, %s102
      %s122 = sphi 0, %s122
      %s124 = sphi 0, %s122
      %s125 = sphi 0, %s124
      %s139 = sphi 0, %s125
      %s143 = sphi 0, %s143
      %s145 = sphi 0, %s143
      %s146 = sphi 0, %s145
      %s160 = sphi 0, %s146
      %s164 = sphi 0, %s164
      %s166 = sphi 0, %s164
      %s167 = sphi 0, %s166
      %s181 = sphi 0, %s167
      %s185 = sphi 0, %s185
      %s187 = sphi 0, %s185
      %s188 = sphi 0, %s187
      %s202 = sphi 0, %s188
      %s206 = sphi 0, %s206
      %s208 = sphi 0, %s206
      %s209 = sphi 0, %s208
      %s223 = sphi 0, %s209
      %s229 = sphi 0, %s231
      %s232 = sphi 0, %s229
      %s233 = sphi 0, %s232
      %s249 = sphi 0, %s233
    $region4: #{tpu_custom_call.1} parent=1 // loop_header_branch
      %25 = sbr.rel (%p23) target = $region8
    $region5: #{tpu_custom_call.1} parent=1 // loop_body
      %s27 = ssub.s32 %s22, 1
      %s28 = ssub.s32 %s22, 2
      %s35 = sadd.s32 1, %s30
      %p36 = scmp.ge.s32.totalorder %s35, 1
      %s37 = scalar_select %p36, 0, %s35
      %s38 = sadd.s32 1, %s29
      %s39 = scalar_select %p36, %s38, %s29
      %p40 = scmp.ge.s32.totalorder %s39, 2
      %s41 = scalar_select %p40, 0, %s39
      %s42 = ssub.s32 %s29, %s41
      %p43 = scmp.eq.s32.totalorder %s42, 0
      %s45 = sadd.s32 %s44, 1
      %s46 = scalar_select %p43, %s44, %s45
      %p49 = pneg %p43
      %p50 = scmp.eq.s32.totalorder %s22, 1
      %p51 = por %p49, %p50
      %p52 = scmp.ne.s32.totalorder %s44, %s47
      %p53 = scmp.eq.s32.totalorder %s22, 0
      %p54 = por %p52, %p53
      %p55 = scmp.ne.s32.totalorder %s44, %s47
      %p56 = scmp.eq.s32.totalorder %s27, 1
      %p57 = por %p55, %p56
      %p58 = scmp.ne.s32.totalorder %s47, %s48
      %p59 = scmp.eq.s32.totalorder %s27, 0
      %p60 = por %p58, %p59
      %p61 = scmp.ne.s32.totalorder %s47, %s48
      %p62 = scmp.eq.s32.totalorder %s28, 1
      %p63 = por %p61, %p62
      %p65 = scmp.ne.s32.totalorder %s48, %s64
      %p66 = scmp.eq.s32.totalorder %s28, 0
      %p67 = por %p65, %p66
      %s68 = ssub.s32 %s29, %s41
      %s69 = ssub.s32 %s30, %s37
      %s70 = sor.u32 %s68, %s69
      %p71 = scmp.eq.s32.totalorder %s70, 0
      %s73 = sadd.s32 %s72, 1
      %s74 = scalar_select %p71, %s72, %s73
      %p77 = pneg %p71
      %p78 = scmp.eq.s32.totalorder %s22, 1
      %p79 = por %p77, %p78
      %p80 = scmp.ne.s32.totalorder %s72, %s75
      %p81 = scmp.eq.s32.totalorder %s22, 0
      %p82 = por %p80, %p81
      %p83 = scmp.ne.s32.totalorder %s72, %s75
      %p84 = scmp.eq.s32.totalorder %s27, 1
      %p85 = por %p83, %p84
      %p86 = scmp.ne.s32.totalorder %s75, %s76
      %p87 = scmp.eq.s32.totalorder %s27, 0
      %p88 = por %p86, %p87
      %p89 = scmp.ne.s32.totalorder %s75, %s76
      %p90 = scmp.eq.s32.totalorder %s28, 1
      %p91 = por %p89, %p90
      %p93 = scmp.ne.s32.totalorder %s76, %s92
      %p94 = scmp.eq.s32.totalorder %s28, 0
      %p95 = por %p93, %p94
      %s96 = ssub.s32 %s29, %s41
      %p97 = scmp.eq.s32.totalorder %s96, 0
      %s99 = sadd.s32 %s98, 1
      %s100 = scalar_select %p97, %s98, %s99
      %p103 = pneg %p97
      %p104 = scmp.eq.s32.totalorder %s22, 1
      %p105 = por %p103, %p104
      %p106 = scmp.ne.s32.totalorder %s98, %s101
      %p107 = scmp.eq.s32.totalorder %s22, 0
      %p108 = por %p106, %p107
      %p109 = scmp.ne.s32.totalorder %s98, %s101
      %p110 = scmp.eq.s32.totalorder %s27, 1
      %p111 = por %p109, %p110
      %p112 = scmp.ne.s32.totalorder %s101, %s102
      %p113 = scmp.eq.s32.totalorder %s27, 0
      %p114 = por %p112, %p113
      %p115 = scmp.ne.s32.totalorder %s101, %s102
      %p116 = scmp.eq.s32.totalorder %s28, 1
      %p117 = por %p115, %p116
      %p119 = scmp.ne.s32.totalorder %s102, %s118
      %p120 = scmp.eq.s32.totalorder %s28, 0
      %p121 = por %p119, %p120
      %s123 = sadd.s32 %s122, 1
      %p126 = scmp.eq.s32.totalorder %s22, 1
      %p127 = scmp.ne.s32.totalorder %s122, %s124
      %p128 = scmp.eq.s32.totalorder %s22, 0
      %p129 = por %p127, %p128
      %p130 = scmp.ne.s32.totalorder %s122, %s124
      %p131 = scmp.eq.s32.totalorder %s27, 1
      %p132 = por %p130, %p131
      %p133 = scmp.ne.s32.totalorder %s124, %s125
      %p134 = scmp.eq.s32.totalorder %s27, 0
      %p135 = por %p133, %p134
      %p136 = scmp.ne.s32.totalorder %s124, %s125
      %p137 = scmp.eq.s32.totalorder %s28, 1
      %p138 = por %p136, %p137
      %p140 = scmp.ne.s32.totalorder %s125, %s139
      %p141 = scmp.eq.s32.totalorder %s28, 0
      %p142 = por %p140, %p141
      %s144 = sadd.s32 %s143, 1
      %p147 = scmp.eq.s32.totalorder %s22, 1
      %p148 = scmp.ne.s32.totalorder %s143, %s145
      %p149 = scmp.eq.s32.totalorder %s22, 0
      %p150 = por %p148, %p149
      %p151 = scmp.ne.s32.totalorder %s143, %s145
      %p152 = scmp.eq.s32.totalorder %s27, 1
      %p153 = por %p151, %p152
      %p154 = scmp.ne.s32.totalorder %s145, %s146
      %p155 = scmp.eq.s32.totalorder %s27, 0
      %p156 = por %p154, %p155
      %p157 = scmp.ne.s32.totalorder %s145, %s146
      %p158 = scmp.eq.s32.totalorder %s28, 1
      %p159 = por %p157, %p158
      %p161 = scmp.ne.s32.totalorder %s146, %s160
      %p162 = scmp.eq.s32.totalorder %s28, 0
      %p163 = por %p161, %p162
      %s165 = sadd.s32 %s164, 1
      %p168 = scmp.eq.s32.totalorder %s22, 1
      %p169 = scmp.ne.s32.totalorder %s164, %s166
      %p170 = scmp.eq.s32.totalorder %s22, 0
      %p171 = por %p169, %p170
      %p172 = scmp.ne.s32.totalorder %s164, %s166
      %p173 = scmp.eq.s32.totalorder %s27, 1
      %p174 = por %p172, %p173
      %p175 = scmp.ne.s32.totalorder %s166, %s167
      %p176 = scmp.eq.s32.totalorder %s27, 0
      %p177 = por %p175, %p176
      %p178 = scmp.ne.s32.totalorder %s166, %s167
      %p179 = scmp.eq.s32.totalorder %s28, 1
      %p180 = por %p178, %p179
      %p182 = scmp.ne.s32.totalorder %s167, %s181
      %p183 = scmp.eq.s32.totalorder %s28, 0
      %p184 = por %p182, %p183
      %s186 = sadd.s32 %s185, 1
      %p189 = scmp.eq.s32.totalorder %s22, 1
      %p190 = scmp.ne.s32.totalorder %s185, %s187
      %p191 = scmp.eq.s32.totalorder %s22, 0
      %p192 = por %p190, %p191
      %p193 = scmp.ne.s32.totalorder %s185, %s187
      %p194 = scmp.eq.s32.totalorder %s27, 1
      %p195 = por %p193, %p194
      %p196 = scmp.ne.s32.totalorder %s187, %s188
      %p197 = scmp.eq.s32.totalorder %s27, 0
      %p198 = por %p196, %p197
      %p199 = scmp.ne.s32.totalorder %s187, %s188
      %p200 = scmp.eq.s32.totalorder %s28, 1
      %p201 = por %p199, %p200
      %p203 = scmp.ne.s32.totalorder %s188, %s202
      %p204 = scmp.eq.s32.totalorder %s28, 0
      %p205 = por %p203, %p204
      %s207 = sadd.s32 %s206, 1
      %p210 = scmp.eq.s32.totalorder %s22, 1
      %p211 = scmp.ne.s32.totalorder %s206, %s208
      %p212 = scmp.eq.s32.totalorder %s22, 0
      %p213 = por %p211, %p212
      %p214 = scmp.ne.s32.totalorder %s206, %s208
      %p215 = scmp.eq.s32.totalorder %s27, 1
      %p216 = por %p214, %p215
      %p217 = scmp.ne.s32.totalorder %s208, %s209
      %p218 = scmp.eq.s32.totalorder %s27, 0
      %p219 = por %p217, %p218
      %p220 = scmp.ne.s32.totalorder %s208, %s209
      %p221 = scmp.eq.s32.totalorder %s28, 1
      %p222 = por %p220, %p221
      %p224 = scmp.ne.s32.totalorder %s209, %s223
      %p225 = scmp.eq.s32.totalorder %s28, 0
      %p226 = por %p224, %p225
      %s227 = ssub.s32 %s29, %s41
      %p228 = scmp.eq.s32.totalorder %s227, 0
      %s230 = sadd.s32 %s229, 1
      %s231 = scalar_select %p228, %s229, %s230
      %p234 = pneg %p228
      %p235 = scmp.eq.s32.totalorder %s22, 1
      %p236 = por %p234, %p235
      %p237 = scmp.ne.s32.totalorder %s229, %s232
      %p238 = scmp.eq.s32.totalorder %s22, 0
      %p239 = por %p237, %p238
      %p240 = scmp.ne.s32.totalorder %s229, %s232
      %p241 = scmp.eq.s32.totalorder %s27, 1
      %p242 = por %p240, %p241
      %p243 = scmp.ne.s32.totalorder %s232, %s233
      %p244 = scmp.eq.s32.totalorder %s27, 0
      %p245 = por %p243, %p244
      %p246 = scmp.ne.s32.totalorder %s232, %s233
      %p247 = scmp.eq.s32.totalorder %s28, 1
      %p248 = por %p246, %p247
      %p250 = scmp.ne.s32.totalorder %s233, %s249
      %p251 = scmp.eq.s32.totalorder %s28, 0
      %p252 = por %p250, %p251
      %p253 = scmp.le.s32.totalorder 1, %s22
      %p254 = scmp.lt.s32.totalorder %s22, 3
      %p255 = pnand %p253, %p254
      %p256 = pneg %p255
      // Predicated region
      $region9: #{tpu_custom_call.1} parent=5 // pred_check
        _
      $region10: #{tpu_custom_call.1} parent=5 // pred_check_branch
        %258 = sbr.rel (%p255) target = $region12
      $region11: #{tpu_custom_call.1} parent=5 // pred_region
        %s259 = ssub.s32 %s22, 1
        // Predicated region
        $region13: #{tpu_custom_call.1} parent=11 // pred_check
          %p260 = pneg %p135
        $region14: #{tpu_custom_call.1} parent=11 // pred_check_branch
          %262 = sbr.rel (%p260) target = $region16
        $region15: #{tpu_custom_call.1} parent=11 // pred_region
          %s264 = ssub.s32 2048, 2048
          %265 = vsyncadd [#allocation9], %s264
          %s266 = sshll.u32 [#allocation8], 4
          %s267 = int_to_ptr.vmem [resolvable:$true] %s266
          %272 = dma.hbm_to_vmem [thread:$0]  %s3, 2048, %s267, [#allocation9], 128, 128, 8
        $region16: #{tpu_custom_call.1} parent=11 // pred_fallthru
          _
        // Predicated region
        $region17: #{tpu_custom_call.1} parent=11 // pred_check
          %p273 = pneg %p156
        $region18: #{tpu_custom_call.1} parent=11 // pred_check_branch
          %275 = sbr.rel (%p273) target = $region20
        $region19: #{tpu_custom_call.1} parent=11 // pred_region
          _
        $region20: #{tpu_custom_call.1} parent=11 // pred_fallthru
          _
        // Predicated region
        $region21: #{tpu_custom_call.1} parent=11 // pred_check
          %p276 = pneg %p177
        $region22: #{tpu_custom_call.1} parent=11 // pred_check_branch
          %278 = sbr.rel (%p276) target = $region24
        $region23: #{tpu_custom_call.1} parent=11 // pred_region
          %s280 = ssub.s32 2048, 2048
          %281 = vsyncadd [#allocation9], %s280
          %s282 = sshll.u32 [#allocation10], 4
          %s283 = int_to_ptr.vmem [resolvable:$true] %s282
          %288 = dma.hbm_to_vmem [thread:$0]  %s5, 2048, %s283, [#allocation9], 128, 128, 8
        $region24: #{tpu_custom_call.1} parent=11 // pred_fallthru
          _
        // Predicated region
        $region25: #{tpu_custom_call.1} parent=11 // pred_check
          %p289 = pneg %p198
        $region26: #{tpu_custom_call.1} parent=11 // pred_check_branch
          %291 = sbr.rel (%p289) target = $region28
        $region27: #{tpu_custom_call.1} parent=11 // pred_region
          %s293 = ssub.s32 2048, 2048
          %294 = vsyncadd [#allocation12], %s293
          %s295 = sshll.u32 [#allocation11], 4
          %s296 = int_to_ptr.vmem [resolvable:$true] %s295
          %301 = dma.hbm_to_vmem [thread:$0]  %s6, 2048, %s296, [#allocation12], 128, 128, 8
        $region28: #{tpu_custom_call.1} parent=11 // pred_fallthru
          _
        // Predicated region
        $region29: #{tpu_custom_call.1} parent=11 // pred_check
          %p302 = pneg %p219
        $region30: #{tpu_custom_call.1} parent=11 // pred_check_branch
          %304 = sbr.rel (%p302) target = $region32
        $region31: #{tpu_custom_call.1} parent=11 // pred_region
          _
        $region32: #{tpu_custom_call.1} parent=11 // pred_fallthru
          _
      $region12: #{tpu_custom_call.1} parent=5 // pred_fallthru
        _
      %p305 = scmp.lt.s32.totalorder %s22, 2
      // Predicated region
      $region33: #{tpu_custom_call.1} parent=5 // pred_check
        %p306 = pneg %p305
      $region34: #{tpu_custom_call.1} parent=5 // pred_check_branch
        %308 = sbr.rel (%p306) target = $region36
      $region35: #{tpu_custom_call.1} parent=5 // pred_region
        // Predicated region
        $region37: #{tpu_custom_call.1} parent=35 // pred_check
          %p309 = pneg %p54
        $region38: #{tpu_custom_call.1} parent=35 // pred_check_branch
          %311 = sbr.rel (%p309) target = $region40
        $region39: #{tpu_custom_call.1} parent=35 // pred_region
          %p312 = scmp.lt.s32.totalorder %s29, 1
          %s313 = scalar_select %p312, %s29, 1
          %s314 = smul.addr %s313, 2
          %s315 = smul.addr %s314, 8
          %s316 = scalar_lea.vmem %s0, %s315
        $region40: #{tpu_custom_call.1} parent=35 // pred_fallthru
          _
        // Predicated region
        $region41: #{tpu_custom_call.1} parent=35 // pred_check
          %p317 = pneg %p82
        $region42: #{tpu_custom_call.1} parent=35 // pred_check_branch
          %319 = sbr.rel (%p317) target = $region44
        $region43: #{tpu_custom_call.1} parent=35 // pred_region
          %s320 = sand.u32 %s72, 1
          %s321 = scalar_lea.sflag [#allocation6], %s320
          %s322 = sand.u32 %s72, 1
          %s323 = smul.addr %s322, 128
          %s324 = scalar_lea.vmem [#allocation5], %s323
          %s325 = smul.u32 16, %s30
          %s327 = ssub.s32 2048, 2048
          %328 = vsyncadd %s321, %s327
          %s329 = smul.addr %s29, 16
          %s330 = sadd.s32 %s325, %s329
          %s331 = smul.addr %s330, 128
          %s332 = scalar_lea.hbm %s1, %s331
          %s333 = sshll.u32 %s324, 4
          %s334 = int_to_ptr.vmem [resolvable:$true] %s333
          %339 = dma.hbm_to_vmem [thread:$0]  %s332, 2048, %s334, %s321, 128, 128, 8
        $region44: #{tpu_custom_call.1} parent=35 // pred_fallthru
          _
        // Predicated region
        $region45: #{tpu_custom_call.1} parent=35 // pred_check
          %p340 = pneg %p108
        $region46: #{tpu_custom_call.1} parent=35 // pred_check_branch
          %342 = sbr.rel (%p340) target = $region48
        $region47: #{tpu_custom_call.1} parent=35 // pred_region
          %p343 = scmp.lt.s32.totalorder %s29, 1
          %s344 = scalar_select %p343, %s29, 1
          %s345 = smul.addr %s344, 2
          %s346 = smul.addr %s345, 8
          %s347 = scalar_lea.vmem %s2, %s346
        $region48: #{tpu_custom_call.1} parent=35 // pred_fallthru
          _
      $region36: #{tpu_custom_call.1} parent=5 // pred_fallthru
        _
      %p348 = scmp.le.s32.totalorder 1, %s22
      %p349 = scmp.lt.s32.totalorder %s22, 3
      %p350 = pnand %p348, %p349
      %p351 = pneg %p350
      // Predicated region
      $region49: #{tpu_custom_call.1} parent=5 // pred_check
        _
      $region50: #{tpu_custom_call.1} parent=5 // pred_check_branch
        %353 = sbr.rel (%p350) target = $region52
      $region51: #{tpu_custom_call.1} parent=5 // pred_region
        %s354 = ssub.s32 %s22, 1
        %s355 = sand.u32 %s75, 1
        %s356 = scalar_lea.sflag [#allocation6], %s355
        %s357 = sand.u32 %s75, 1
        %s358 = smul.addr %s357, 128
        %s359 = scalar_lea.vmem [#allocation5], %s358
        // Predicated region
        $region53: #{tpu_custom_call.1} parent=51 // pred_check
          %p360 = pneg %p88
        $region54: #{tpu_custom_call.1} parent=51 // pred_check_branch
          %362 = sbr.rel (%p360) target = $region56
        $region55: #{tpu_custom_call.1} parent=51 // pred_region
          %363 = dma.done %s356, 2048
        $region56: #{tpu_custom_call.1} parent=51 // pred_fallthru
          _
        // Predicated region
        $region57: #{tpu_custom_call.1} parent=51 // pred_check
          %p364 = pneg %p135
        $region58: #{tpu_custom_call.1} parent=51 // pred_check_branch
          %366 = sbr.rel (%p364) target = $region60
        $region59: #{tpu_custom_call.1} parent=51 // pred_region
          %367 = dma.done [#allocation9], 2048
        $region60: #{tpu_custom_call.1} parent=51 // pred_fallthru
          _
        // Predicated region
        $region61: #{tpu_custom_call.1} parent=51 // pred_check
          %p368 = pneg %p177
        $region62: #{tpu_custom_call.1} parent=51 // pred_check_branch
          %370 = sbr.rel (%p368) target = $region64
        $region63: #{tpu_custom_call.1} parent=51 // pred_region
          %371 = dma.done [#allocation9], 2048
        $region64: #{tpu_custom_call.1} parent=51 // pred_fallthru
          _
        // Predicated region
        $region65: #{tpu_custom_call.1} parent=51 // pred_check
          %p372 = pneg %p198
        $region66: #{tpu_custom_call.1} parent=51 // pred_check_branch
          %374 = sbr.rel (%p372) target = $region68
        $region67: #{tpu_custom_call.1} parent=51 // pred_region
          %375 = dma.done [#allocation12], 2048
        $region68: #{tpu_custom_call.1} parent=51 // pred_fallthru
          _
        %p376 = scmp.lt.s32.totalorder %s31, 1
        %s377 = scalar_select %p376, %s31, 1
        %s378 = smul.addr %s377, 2
        %s379 = smul.addr %s378, 8
        %s380 = scalar_lea.vmem %s0, %s379
        %p381 = pneg %p60
        %p382 = pneg %p57
        %s383 = sand.u32 %s75, 1
        %s384 = scalar_lea.sflag [#allocation6], %s383
        %s385 = sand.u32 %s75, 1
        %s386 = smul.addr %s385, 128
        %s387 = scalar_lea.vmem [#allocation5], %s386
        %p388 = pneg %p88
        %p389 = pneg %p85
        %p390 = scmp.lt.s32.totalorder %s31, 1
        %s391 = scalar_select %p390, %s31, 1
        %s392 = smul.addr %s391, 2
        %s393 = smul.addr %s392, 8
        %s394 = scalar_lea.vmem %s2, %s393
        %p395 = pneg %p114
        %p396 = pneg %p111
        %p397 = pneg %p135
        %p398 = pneg %p132
        %p399 = pneg %p156
        %p400 = pneg %p153
        %p401 = pneg %p177
        %p402 = pneg %p174
        %p403 = pneg %p198
        %p404 = pneg %p195
        %p405 = pneg %p219
        %p406 = pneg %p216
        %p407 = pneg %p245
        %p408 = pneg %p242
        %s409 = sand.u32 %s232, 1
        %s410 = scalar_lea.sflag [#allocation7], %s409
        %s411 = sand.u32 %s232, 1
        %s412 = smul.addr %s411, 16
        %s413 = scalar_lea.vmem [#allocation13], %s412
        %p414 = scmp.lt.s32.totalorder %s31, 1
        %s415 = scalar_select %p414, %s31, 1
        %s416 = smul.addr %s415, 2
        %s417 = smul.addr %s416, 8
        %s418 = scalar_lea.vmem %s0, %s417
        %s419 = smul.u32 16, %s32
        %p420 = scmp.lt.s32.totalorder %s31, 1
        %s421 = scalar_select %p420, %s31, 1
        %s422 = smul.addr %s421, 2
        %s423 = smul.addr %s422, 8
        %s424 = scalar_lea.vmem %s2, %s423
        %p426 = scmp.eq.s32.totalorder %s32, 0
        // Predicated region
        $region69: #{tpu_custom_call.1} parent=51 // pred_check
          %p427 = pneg %p426
        $region70: #{tpu_custom_call.1} parent=51 // pred_check_branch
          %429 = sbr.rel (%p427) target = $region72
        $region71: #{tpu_custom_call.1} parent=51 // pred_region
          %vm430 = vcmask 7168
          %431 = vst.msk [vmem:[#allocation2] sm:$0xff] %vm430, -inf
          %432 = vst.msk [vmem:[#allocation2 + $0x8] sm:$0xff] %vm430, -inf
          %433 = vst.msk [vmem:[#allocation3] sm:$0xff] %vm430, 0.0
          %434 = vst.msk [vmem:[#allocation3 + $0x8] sm:$0xff] %vm430, 0.0
          %435 = vst [vmem:[#allocation4] sm:$0xff] 0.0
          %436 = vst [vmem:[#allocation4 + $0x8] sm:$0xff] 0.0
        $region72: #{tpu_custom_call.1} parent=51 // pred_fallthru
          _
        %v437 = vld [vmem:[%s418] sm:$0xff]
        %v438 = vld [vmem:[%s418 + $0x8] sm:$0xff]
        %v439 = vpack.c.bf16 %v438, %v437
        %v440 = vld [vmem:[%s359] sm:$0xff]
        %v441 = vld [vmem:[%s359 + $0x8] sm:$0xff]
        %v442 = vld [vmem:[%s359 + $0x10] sm:$0xff]
        %v443 = vld [vmem:[%s359 + $0x18] sm:$0xff]
        %v444 = vld [vmem:[%s359 + $0x20] sm:$0xff]
        %v445 = vld [vmem:[%s359 + $0x28] sm:$0xff]
        %v446 = vld [vmem:[%s359 + $0x30] sm:$0xff]
        %v447 = vld [vmem:[%s359 + $0x38] sm:$0xff]
        %v448 = vld [vmem:[%s359 + $0x40] sm:$0xff]
        %v449 = vld [vmem:[%s359 + $0x48] sm:$0xff]
        %v450 = vld [vmem:[%s359 + $0x50] sm:$0xff]
        %v451 = vld [vmem:[%s359 + $0x58] sm:$0xff]
        %v452 = vld [vmem:[%s359 + $0x60] sm:$0xff]
        %v453 = vld [vmem:[%s359 + $0x68] sm:$0xff]
        %v454 = vld [vmem:[%s359 + $0x70] sm:$0xff]
        %v455 = vld [vmem:[%s359 + $0x78] sm:$0xff]
        %v456 = vpack.c.bf16 %v441, %v440
        %v457 = vpack.c.bf16 %v443, %v442
        %v458 = vpack.c.bf16 %v445, %v444
        %v459 = vpack.c.bf16 %v447, %v446
        %v460 = vpack.c.bf16 %v449, %v448
        %v461 = vpack.c.bf16 %v451, %v450
        %v462 = vpack.c.bf16 %v453, %v452
        %v463 = vpack.c.bf16 %v455, %v454
        %464 = vmatprep.subr.bf16.mxu0 0
        %465 = vmatpush1.bf16.xpose.msra.mxu0 %v456
        %466 = vmatprep.subr.bf16.mxu0 0
        %467 = vmatpush1.bf16.xpose.msra.mxu0 %v457
        %468 = vmatprep.subr.bf16.mxu0 0
        %469 = vmatpush1.bf16.xpose.msra.mxu0 %v458
        %470 = vmatprep.subr.bf16.mxu0 0
        %471 = vmatpush1.bf16.xpose.msra.mxu0 %v459
        %472 = vmatprep.subr.bf16.mxu0 0
        %473 = vmatpush1.bf16.xpose.msra.mxu0 %v460
        %474 = vmatprep.subr.bf16.mxu0 0
        %475 = vmatpush1.bf16.xpose.msra.mxu0 %v461
        %476 = vmatprep.subr.bf16.mxu0 0
        %477 = vmatpush1.bf16.xpose.msra.mxu0 %v462
        %478 = vmatprep.subr.bf16.mxu0 0
        %479 = vmatpush1.bf16.xpose.msra.mxu0 %v463
        %480 = vmatprep.subr.bf16.mxu0 0
        %481 = vmatpush1.bf16.xpose.msra.mxu0 0
        %482 = vmatprep.subr.bf16.mxu0 0
        %483 = vmatpush1.bf16.xpose.msra.mxu0 0
        %484 = vmatprep.subr.bf16.mxu0 0
        %485 = vmatpush1.bf16.xpose.msra.mxu0 0
        %486 = vmatprep.subr.bf16.mxu0 0
        %487 = vmatpush1.bf16.xpose.msra.mxu0 0
        %488 = vmatprep.subr.bf16.mxu0 0
        %489 = vmatpush1.bf16.xpose.msra.mxu0 0
        %490 = vmatprep.subr.bf16.mxu0 0
        %491 = vmatpush1.bf16.xpose.msra.mxu0 0
        %492 = vmatprep.subr.bf16.mxu0 0
        %493 = vmatpush1.bf16.xpose.msra.mxu0 0
        %494 = vmatprep.subr.bf16.mxu0 0
        %495 = vmatpush1.bf16.xpose.msra.mxu0 0
        %496 = vmatprep.mubr.bf16.mxu0 0
        %497 = vmatmul.mubr.bf16.gmra.mrb[0].mxu0 %v439
        %v498 = vpop.f32.mrb[0].mxu0
        %v499 = vadd.f32 0.0, %v498
        %v500 = vpop.f32.mrb[0].mxu0
        %v501 = vpop.f32.mrb[0].mxu0
        %v502 = vadd.f32 0.0, %v501
        %v503 = vpop.f32.mrb[0].mxu0
        %504 = vdwg.mxu0
        %s505 = smul.u32 %s32, 128
        %v506 = vlaneseq
        %v507 = vand.u32 %v506, 127
        %v508 = vstv %s505
        %v509 = vadd.s32 %v508, %v507
        %vm510 = vcmp.lt.s32.totalorder %v509, 8
        %v511 = vsel %vm510, 1, 0
        %vm512 = vcmp.eq.s32.totalorder %v511, 1
        %v513 = vsel %vm512, %v499, -1e+30
        %v514 = vsel %vm512, %v502, -1e+30
        %v515 = vld [vmem:[#allocation2] sm:$0xff]
        %v516 = vld [vmem:[#allocation2 + $0x8] sm:$0xff]
        %517 = vmax.xlane.f32.xlu0 %v513
        %v518 = vpop.xlane.xlu0 %517
        %519 = vmax.xlane.f32.xlu0 %v514
        %v520 = vpop.xlane.xlu0 %519
        %v521 = vmax.f32 %v515, %v518
        %v522 = vmax.f32 %v516, %v520
        %v523 = vsub.f32 %v515, %v521
        %v524 = vsub.f32 %v516, %v522
        %v525 = vmul.f32 %v523, 1.442695
        %v526 = vpow.pop %v525
        %v527 = vmul.f32 %v524, 1.442695
        %v528 = vpow.pop %v527
        %530 = vset.pattern.permute.xlu0 0
        %531 = vperm.xlu0 %530, %v521
        %v532 = vpop.permute.xlu0 %531
        %535 = vset.pattern.permute.xlu0 0
        %536 = vperm.xlu0 %535, %v522
        %v537 = vpop.permute.xlu0 %536
        %v539 = vsub.f32 %v513, %v532
        %v540 = vsub.f32 %v514, %v537
        %v541 = vmul.f32 %v539, 1.442695
        %v542 = vpow.pop %v541
        %v543 = vmul.f32 %v540, 1.442695
        %v544 = vpow.pop %v543
        %v545 = vld [vmem:[#allocation3] sm:$0xff]
        %v546 = vld [vmem:[#allocation3 + $0x8] sm:$0xff]
        %v547 = vmul.f32 %v526, %v545
        %v548 = vmul.f32 %v528, %v546
        %549 = vadd.xlane.f32.xlu0 %v542
        %v550 = vpop.xlane.xlu0 %549
        %551 = vadd.xlane.f32.xlu0 %v544
        %v552 = vpop.xlane.xlu0 %551
        %v553 = vadd.f32 %v547, %v550
        %v554 = vadd.f32 %v548, %v552
        %vm555 = vcmask 7168
        %556 = vst.msk [vmem:[#allocation3] sm:$0xff] %vm555, %v553
        %557 = vst.msk [vmem:[#allocation3 + $0x8] sm:$0xff] %vm555, %v554
        %v558 = vpack.c.bf16 %v544, %v542
        %559 = vmatprep.subr.bf16.mxu0 0
        %560 = vmatpush1.bf16.msra.mxu0 %v456
        %561 = vmatprep.subr.bf16.mxu0 0
        %562 = vmatpush1.bf16.msra.mxu0 %v457
        %563 = vmatprep.subr.bf16.mxu0 0
        %564 = vmatpush1.bf16.msra.mxu0 %v458
        %565 = vmatprep.subr.bf16.mxu0 0
        %566 = vmatpush1.bf16.msra.mxu0 %v459
        %567 = vmatprep.subr.bf16.mxu0 0
        %568 = vmatpush1.bf16.msra.mxu0 %v460
        %569 = vmatprep.subr.bf16.mxu0 0
        %570 = vmatpush1.bf16.msra.mxu0 %v461
        %571 = vmatprep.subr.bf16.mxu0 0
        %572 = vmatpush1.bf16.msra.mxu0 %v462
        %573 = vmatprep.subr.bf16.mxu0 0
        %574 = vmatpush1.bf16.msra.mxu0 %v463
        %575 = vmatprep.subr.bf16.mxu0 0
        %576 = vmatpush1.bf16.msra.mxu0 0
        %577 = vmatprep.subr.bf16.mxu0 0
        %578 = vmatpush1.bf16.msra.mxu0 0
        %579 = vmatprep.subr.bf16.mxu0 0
        %580 = vmatpush1.bf16.msra.mxu0 0
        %581 = vmatprep.subr.bf16.mxu0 0
        %582 = vmatpush1.bf16.msra.mxu0 0
        %583 = vmatprep.subr.bf16.mxu0 0
        %584 = vmatpush1.bf16.msra.mxu0 0
        %585 = vmatprep.subr.bf16.mxu0 0
        %586 = vmatpush1.bf16.msra.mxu0 0
        %587 = vmatprep.subr.bf16.mxu0 0
        %588 = vmatpush1.bf16.msra.mxu0 0
        %589 = vmatprep.subr.bf16.mxu0 0
        %590 = vmatpush1.bf16.msra.mxu0 0
        %591 = vmatprep.mubr.bf16.mxu0 0
        %592 = vmatmul.mubr.bf16.gmra.mrb[0].mxu0 %v558
        %v593 = vpop.f32.mrb[0].mxu0
        %v594 = vadd.f32 0.0, %v593
        %v595 = vpop.f32.mrb[0].mxu0
        %v596 = vpop.f32.mrb[0].mxu0
        %v597 = vadd.f32 0.0, %v596
        %v598 = vpop.f32.mrb[0].mxu0
        %599 = vdwg.mxu0
        %v600 = vld [vmem:[#allocation4] sm:$0xff]
        %v601 = vld [vmem:[#allocation4 + $0x8] sm:$0xff]
        %603 = vset.pattern.permute.xlu0 0
        %604 = vperm.xlu0 %603, %v526
        %v605 = vpop.permute.xlu0 %604
        %608 = vset.pattern.permute.xlu0 0
        %609 = vperm.xlu0 %608, %v528
        %v610 = vpop.permute.xlu0 %609
        %v612 = vmul.f32 %v605, %v600
        %v613 = vmul.f32 %v610, %v601
        %v614 = vadd.f32 %v612, %v594
        %v615 = vadd.f32 %v613, %v597
        %616 = vst [vmem:[#allocation4] sm:$0xff] %v614
        %617 = vst [vmem:[#allocation4 + $0x8] sm:$0xff] %v615
        %618 = vst.msk [vmem:[#allocation2] sm:$0xff] %vm555, %v521
        %619 = vst.msk [vmem:[#allocation2 + $0x8] sm:$0xff] %vm555, %v522
        // Predicated region
        $region73: #{tpu_custom_call.1} parent=51 // pred_check
          %p620 = pneg %p426
        $region74: #{tpu_custom_call.1} parent=51 // pred_check_branch
          %622 = sbr.rel (%p620) target = $region76
        $region75: #{tpu_custom_call.1} parent=51 // pred_region
          %v623 = vld [vmem:[#allocation3] sm:$0xff]
          %v624 = vld [vmem:[#allocation3 + $0x8] sm:$0xff]
          %v625 = vrcp.pop %v623
          %v626 = vrcp.pop %v624
          %v627 = vld [vmem:[#allocation4] sm:$0xff]
          %v628 = vld [vmem:[#allocation4 + $0x8] sm:$0xff]
          %630 = vset.pattern.permute.xlu0 0
          %631 = vperm.xlu0 %630, %v625
          %v632 = vpop.permute.xlu0 %631
          %635 = vset.pattern.permute.xlu0 0
          %636 = vperm.xlu0 %635, %v626
          %v637 = vpop.permute.xlu0 %636
          %v639 = vmul.f32 %v627, %v632
          %v640 = vmul.f32 %v628, %v637
          %v641 = vpack.c.bf16 %v640, %v639
          %v642 = vld [vmem:[#allocation8] sm:$0xff]
          %v643 = vld [vmem:[#allocation8 + $0x8] sm:$0xff]
          %v644 = vld [vmem:[#allocation8 + $0x10] sm:$0xff]
          %v645 = vld [vmem:[#allocation8 + $0x18] sm:$0xff]
          %v646 = vld [vmem:[#allocation8 + $0x20] sm:$0xff]
          %v647 = vld [vmem:[#allocation8 + $0x28] sm:$0xff]
          %v648 = vld [vmem:[#allocation8 + $0x30] sm:$0xff]
          %v649 = vld [vmem:[#allocation8 + $0x38] sm:$0xff]
          %v650 = vld [vmem:[#allocation8 + $0x40] sm:$0xff]
          %v651 = vld [vmem:[#allocation8 + $0x48] sm:$0xff]
          %v652 = vld [vmem:[#allocation8 + $0x50] sm:$0xff]
          %v653 = vld [vmem:[#allocation8 + $0x58] sm:$0xff]
          %v654 = vld [vmem:[#allocation8 + $0x60] sm:$0xff]
          %v655 = vld [vmem:[#allocation8 + $0x68] sm:$0xff]
          %v656 = vld [vmem:[#allocation8 + $0x70] sm:$0xff]
          %v657 = vld [vmem:[#allocation8 + $0x78] sm:$0xff]
          %v658 = vpack.c.bf16 %v643, %v642
          %v659 = vpack.c.bf16 %v645, %v644
          %v660 = vpack.c.bf16 %v647, %v646
          %v661 = vpack.c.bf16 %v649, %v648
          %v662 = vpack.c.bf16 %v651, %v650
          %v663 = vpack.c.bf16 %v653, %v652
          %v664 = vpack.c.bf16 %v655, %v654
          %v665 = vpack.c.bf16 %v657, %v656
          %v666 = vld [vmem:[%s4] sm:$0x1]
          %v668 = vlaneseq
          %v669 = vshrl.u32 %v668, 7
          %v670 = vsub.s32 0, %v669
          %v671 = vrot.slane %v666, %v670
          %673 = vmatprep.subr.bf16.mxu0 0
          %674 = vmatpush1.bf16.msra.mxu0 %v658
          %675 = vmatprep.subr.bf16.mxu0 0
          %676 = vmatpush1.bf16.msra.mxu0 %v659
          %677 = vmatprep.subr.bf16.mxu0 0
          %678 = vmatpush1.bf16.msra.mxu0 %v660
          %679 = vmatprep.subr.bf16.mxu0 0
          %680 = vmatpush1.bf16.msra.mxu0 %v661
          %681 = vmatprep.subr.bf16.mxu0 0
          %682 = vmatpush1.bf16.msra.mxu0 %v662
          %683 = vmatprep.subr.bf16.mxu0 0
          %684 = vmatpush1.bf16.msra.mxu0 %v663
          %685 = vmatprep.subr.bf16.mxu0 0
          %686 = vmatpush1.bf16.msra.mxu0 %v664
          %687 = vmatprep.subr.bf16.mxu0 0
          %688 = vmatpush1.bf16.msra.mxu0 %v665
          %689 = vmatprep.subr.bf16.mxu0 0
          %690 = vmatpush1.bf16.msra.mxu0 0
          %691 = vmatprep.subr.bf16.mxu0 0
          %692 = vmatpush1.bf16.msra.mxu0 0
          %693 = vmatprep.subr.bf16.mxu0 0
          %694 = vmatpush1.bf16.msra.mxu0 0
          %695 = vmatprep.subr.bf16.mxu0 0
          %696 = vmatpush1.bf16.msra.mxu0 0
          %697 = vmatprep.subr.bf16.mxu0 0
          %698 = vmatpush1.bf16.msra.mxu0 0
          %699 = vmatprep.subr.bf16.mxu0 0
          %700 = vmatpush1.bf16.msra.mxu0 0
          %701 = vmatprep.subr.bf16.mxu0 0
          %702 = vmatpush1.bf16.msra.mxu0 0
          %703 = vmatprep.subr.bf16.mxu0 0
          %704 = vmatpush1.bf16.msra.mxu0 0
          %705 = vmatprep.mubr.bf16.mxu0 0
          %706 = vmatmul.mubr.bf16.gmra.mrb[0].mxu0 %v439
          %v707 = vpop.f32.mrb[0].mxu0
          %v708 = vadd.f32 %v671, %v707
          %v709 = vpop.f32.mrb[0].mxu0
          %v710 = vpop.f32.mrb[0].mxu0
          %v711 = vadd.f32 %v671, %v710
          %v712 = vpop.f32.mrb[0].mxu0
          %713 = vdwg.mxu0
          %v714 = vxor.u32 %v708, 2147483648
          %v715 = vxor.u32 %v711, 2147483648
          %v716 = vmul.f32 %v714, 1.442695
          %v717 = vpow.pop %v716
          %v718 = vmul.f32 %v715, 1.442695
          %v719 = vpow.pop %v718
          %v720 = vadd.f32 %v717, 1.0
          %v721 = vadd.f32 %v719, 1.0
          %v722 = vrcp.pop %v720
          %v723 = vmul.f32 1.0, %v722
          %v724 = vrcp.pop %v721
          %v725 = vmul.f32 1.0, %v724
          %v726 = vld [vmem:[#allocation10] sm:$0xff]
          %v727 = vld [vmem:[#allocation10 + $0x8] sm:$0xff]
          %v728 = vld [vmem:[#allocation10 + $0x10] sm:$0xff]
          %v729 = vld [vmem:[#allocation10 + $0x18] sm:$0xff]
          %v730 = vld [vmem:[#allocation10 + $0x20] sm:$0xff]
          %v731 = vld [vmem:[#allocation10 + $0x28] sm:$0xff]
          %v732 = vld [vmem:[#allocation10 + $0x30] sm:$0xff]
          %v733 = vld [vmem:[#allocation10 + $0x38] sm:$0xff]
          %v734 = vld [vmem:[#allocation10 + $0x40] sm:$0xff]
          %v735 = vld [vmem:[#allocation10 + $0x48] sm:$0xff]
          %v736 = vld [vmem:[#allocation10 + $0x50] sm:$0xff]
          %v737 = vld [vmem:[#allocation10 + $0x58] sm:$0xff]
          %v738 = vld [vmem:[#allocation10 + $0x60] sm:$0xff]
          %v739 = vld [vmem:[#allocation10 + $0x68] sm:$0xff]
          %v740 = vld [vmem:[#allocation10 + $0x70] sm:$0xff]
          %v741 = vld [vmem:[#allocation10 + $0x78] sm:$0xff]
          %v742 = vpack.c.bf16 %v727, %v726
          %v743 = vpack.c.bf16 %v729, %v728
          %v744 = vpack.c.bf16 %v731, %v730
          %v745 = vpack.c.bf16 %v733, %v732
          %v746 = vpack.c.bf16 %v735, %v734
          %v747 = vpack.c.bf16 %v737, %v736
          %v748 = vpack.c.bf16 %v739, %v738
          %v749 = vpack.c.bf16 %v741, %v740
          %v750 = vld [vmem:[#allocation11] sm:$0xff]
          %v751 = vld [vmem:[#allocation11 + $0x8] sm:$0xff]
          %v752 = vld [vmem:[#allocation11 + $0x10] sm:$0xff]
          %v753 = vld [vmem:[#allocation11 + $0x18] sm:$0xff]
          %v754 = vld [vmem:[#allocation11 + $0x20] sm:$0xff]
          %v755 = vld [vmem:[#allocation11 + $0x28] sm:$0xff]
          %v756 = vld [vmem:[#allocation11 + $0x30] sm:$0xff]
          %v757 = vld [vmem:[#allocation11 + $0x38] sm:$0xff]
          %v758 = vld [vmem:[#allocation11 + $0x40] sm:$0xff]
          %v759 = vld [vmem:[#allocation11 + $0x48] sm:$0xff]
          %v760 = vld [vmem:[#allocation11 + $0x50] sm:$0xff]
          %v761 = vld [vmem:[#allocation11 + $0x58] sm:$0xff]
          %v762 = vld [vmem:[#allocation11 + $0x60] sm:$0xff]
          %v763 = vld [vmem:[#allocation11 + $0x68] sm:$0xff]
          %v764 = vld [vmem:[#allocation11 + $0x70] sm:$0xff]
          %v765 = vld [vmem:[#allocation11 + $0x78] sm:$0xff]
          %v766 = vpack.c.bf16 %v751, %v750
          %v767 = vpack.c.bf16 %v753, %v752
          %v768 = vpack.c.bf16 %v755, %v754
          %v769 = vpack.c.bf16 %v757, %v756
          %v770 = vpack.c.bf16 %v759, %v758
          %v771 = vpack.c.bf16 %v761, %v760
          %v772 = vpack.c.bf16 %v763, %v762
          %v773 = vpack.c.bf16 %v765, %v764
          %774 = vmatprep.subr.bf16.mxu0 0
          %775 = vmatpush1.bf16.msra.mxu0 %v766
          %776 = vmatprep.subr.bf16.mxu0 0
          %777 = vmatpush1.bf16.msra.mxu0 %v767
          %778 = vmatprep.subr.bf16.mxu0 0
          %779 = vmatpush1.bf16.msra.mxu0 %v768
          %780 = vmatprep.subr.bf16.mxu0 0
          %781 = vmatpush1.bf16.msra.mxu0 %v769
          %782 = vmatprep.subr.bf16.mxu0 0
          %783 = vmatpush1.bf16.msra.mxu0 %v770
          %784 = vmatprep.subr.bf16.mxu0 0
          %785 = vmatpush1.bf16.msra.mxu0 %v771
          %786 = vmatprep.subr.bf16.mxu0 0
          %787 = vmatpush1.bf16.msra.mxu0 %v772
          %788 = vmatprep.subr.bf16.mxu0 0
          %789 = vmatpush1.bf16.msra.mxu0 %v773
          %790 = vmatprep.subr.bf16.mxu0 0
          %791 = vmatpush1.bf16.msra.mxu0 0
          %792 = vmatprep.subr.bf16.mxu0 0
          %793 = vmatpush1.bf16.msra.mxu0 0
          %794 = vmatprep.subr.bf16.mxu0 0
          %795 = vmatpush1.bf16.msra.mxu0 0
          %796 = vmatprep.subr.bf16.mxu0 0
          %797 = vmatpush1.bf16.msra.mxu0 0
          %798 = vmatprep.subr.bf16.mxu0 0
          %799 = vmatpush1.bf16.msra.mxu0 0
          %800 = vmatprep.subr.bf16.mxu0 0
          %801 = vmatpush1.bf16.msra.mxu0 0
          %802 = vmatprep.subr.bf16.mxu0 0
          %803 = vmatpush1.bf16.msra.mxu0 0
          %804 = vmatprep.subr.bf16.mxu0 0
          %805 = vmatpush1.bf16.msra.mxu0 0
          %806 = vmatprep.mubr.bf16.mxu0 0
          %807 = vmatmul.mubr.bf16.gmra.mrb[0].mxu0 %v439
          %v808 = vpop.f32.mrb[0].mxu0
          %v809 = vadd.f32 0.0, %v808
          %v810 = vpop.f32.mrb[0].mxu0
          %v811 = vpop.f32.mrb[0].mxu0
          %v812 = vadd.f32 0.0, %v811
          %v813 = vpop.f32.mrb[0].mxu0
          %814 = vdwg.mxu0
          %815 = vmatprep.subr.bf16.mxu0 0
          %816 = vmatpush1.bf16.msra.mxu0 %v742
          %817 = vmatprep.subr.bf16.mxu0 0
          %818 = vmatpush1.bf16.msra.mxu0 %v743
          %819 = vmatprep.subr.bf16.mxu0 0
          %820 = vmatpush1.bf16.msra.mxu0 %v744
          %821 = vmatprep.subr.bf16.mxu0 0
          %822 = vmatpush1.bf16.msra.mxu0 %v745
          %823 = vmatprep.subr.bf16.mxu0 0
          %824 = vmatpush1.bf16.msra.mxu0 %v746
          %825 = vmatprep.subr.bf16.mxu0 0
          %826 = vmatpush1.bf16.msra.mxu0 %v747
          %827 = vmatprep.subr.bf16.mxu0 0
          %828 = vmatpush1.bf16.msra.mxu0 %v748
          %829 = vmatprep.subr.bf16.mxu0 0
          %830 = vmatpush1.bf16.msra.mxu0 %v749
          %831 = vmatprep.subr.bf16.mxu0 0
          %832 = vmatpush1.bf16.msra.mxu0 0
          %833 = vmatprep.subr.bf16.mxu0 0
          %834 = vmatpush1.bf16.msra.mxu0 0
          %835 = vmatprep.subr.bf16.mxu0 0
          %836 = vmatpush1.bf16.msra.mxu0 0
          %837 = vmatprep.subr.bf16.mxu0 0
          %838 = vmatpush1.bf16.msra.mxu0 0
          %839 = vmatprep.subr.bf16.mxu0 0
          %840 = vmatpush1.bf16.msra.mxu0 0
          %841 = vmatprep.subr.bf16.mxu0 0
          %842 = vmatpush1.bf16.msra.mxu0 0
          %843 = vmatprep.subr.bf16.mxu0 0
          %844 = vmatpush1.bf16.msra.mxu0 0
          %845 = vmatprep.subr.bf16.mxu0 0
          %846 = vmatpush1.bf16.msra.mxu0 0
          %847 = vmatprep.mubr.bf16.mxu0 0
          %848 = vmatmul.mubr.bf16.gmra.mrb[0].mxu0 %v641
          %v849 = vpop.f32.mrb[0].mxu0
          %v850 = vadd.f32 %v809, %v849
          %v851 = vpop.f32.mrb[0].mxu0
          %v852 = vpop.f32.mrb[0].mxu0
          %v853 = vadd.f32 %v812, %v852
          %v854 = vpop.f32.mrb[0].mxu0
          %855 = vdwg.mxu0
          %v856 = vld [vmem:[%s7] sm:$0x1]
          %v858 = vlaneseq
          %v859 = vshrl.u32 %v858, 7
          %v860 = vsub.s32 0, %v859
          %v861 = vrot.slane %v856, %v860
          %v863 = vadd.f32 %v850, %v861
          %v864 = vadd.f32 %v853, %v861
          %v865 = vtanh.pop %v863
          %v866 = vtanh.pop %v864
          %v867 = vld [vmem:[%s424] sm:$0xff]
          %v868 = vld [vmem:[%s424 + $0x8] sm:$0xff]
          %870 = vset.pattern.permute.xlu0 0
          %871 = vperm.xlu0 %870, %v867
          %v872 = vpop.permute.xlu0 %871
          %875 = vset.pattern.permute.xlu0 0
          %876 = vperm.xlu0 %875, %v868
          %v877 = vpop.permute.xlu0 %876
          %v879 = vmul.f32 %v865, %v872
          %v880 = vmul.f32 %v866, %v877
          %v881 = vsub.f32 %v879, %v437
          %v882 = vsub.f32 %v880, %v438
          %v883 = vmul.f32 %v723, %v881
          %v884 = vmul.f32 %v725, %v882
          %v885 = vadd.f32 %v437, %v883
          %v886 = vadd.f32 %v438, %v884
          %887 = vst [vmem:[%s413] sm:$0xff] %v885
          %888 = vst [vmem:[%s413 + $0x8] sm:$0xff] %v886
        $region76: #{tpu_custom_call.1} parent=51 // pred_fallthru
          _
        %s889 = sand.u32 %s232, 1
        %s890 = scalar_lea.sflag [#allocation7], %s889
        %s891 = sand.u32 %s232, 1
        %s892 = smul.addr %s891, 16
        %s893 = scalar_lea.vmem [#allocation13], %s892
        // Predicated region
        $region77: #{tpu_custom_call.1} parent=51 // pred_check
          %p894 = pneg %p242
        $region78: #{tpu_custom_call.1} parent=51 // pred_check_branch
          %896 = sbr.rel (%p894) target = $region80
        $region79: #{tpu_custom_call.1} parent=51 // pred_region
          %s898 = ssub.s32 256, 256
          %899 = vsyncadd %s890, %s898
          %s900 = smul.addr %s31, 2
          %s901 = smul.addr %s900, 128
          %s902 = scalar_lea.hbm %s8, %s901
          %s903 = sshll.u32 %s893, 4
          %s904 = int_to_ptr.vmem [resolvable:$true] %s903
          %909 = dma.vmem_to_hbm [thread:$0]  %s904, 256, %s902, %s890, 128, 128, 8
        $region80: #{tpu_custom_call.1} parent=51 // pred_fallthru
          _
      $region52: #{tpu_custom_call.1} parent=5 // pred_fallthru
        _
      %p910 = scmp.le.s32.totalorder 2, %s22
      // Predicated region
      $region81: #{tpu_custom_call.1} parent=5 // pred_check
        %p911 = pneg %p910
      $region82: #{tpu_custom_call.1} parent=5 // pred_check_branch
        %913 = sbr.rel (%p911) target = $region84
      $region83: #{tpu_custom_call.1} parent=5 // pred_region
        %s914 = ssub.s32 %s22, 2
        // Predicated region
        $region85: #{tpu_custom_call.1} parent=83 // pred_check
          %p915 = pneg %p248
        $region86: #{tpu_custom_call.1} parent=83 // pred_check_branch
          %917 = sbr.rel (%p915) target = $region88
        $region87: #{tpu_custom_call.1} parent=83 // pred_region
          %s918 = sand.u32 %s233, 1
          %s919 = scalar_lea.sflag [#allocation7], %s918
          %s920 = sand.u32 %s233, 1
          %s921 = smul.addr %s920, 16
          %s922 = scalar_lea.vmem [#allocation13], %s921
          %923 = dma.done %s919, 256
        $region88: #{tpu_custom_call.1} parent=83 // pred_fallthru
          _
      $region84: #{tpu_custom_call.1} parent=5 // pred_fallthru
        _
    $region6: #{tpu_custom_call.1} parent=1 // loop_footer
      %s26 = sadd.s32 1, %s22
    $region7: #{tpu_custom_call.1} parent=1 // loop_footer_branch
      %21 = sbr.rel target = $region3
    $region8: #{tpu_custom_call.1} parent=1 // loop_exit
      _
    %924 = vsyncpa [#allocation6], 1
    %s925 = scalar_lea.sflag [#allocation6], 1
    %926 = vsyncpa %s925, 1
    %927 = vsyncpa [#allocation9], 1
    %928 = vsyncpa [#allocation12], 1
    %929 = vsyncpa [#allocation7], 1
    %s930 = scalar_lea.sflag [#allocation7], 1
    %931 = vsyncpa %s930, 1

</llo_original>
